<compile_context>
chip_gen: v7x
topology: tpu7x:2x2x1
jax: 0.10.0
libtpu: 0.0.40
codegen_flags: <defaults>
</compile_context>

<pallas_src>
import functools

import jax
import jax.numpy as jnp
from jax.experimental import pallas as pl
from jax.experimental.pallas import tpu as pltpu

NEG_SLOPE = 0.01  # nn.LeakyReLU default in the PyTorch module

# Memory-space enum (new name, with fallback for older jax).
_MS = getattr(pltpu, "MemorySpace", None) or getattr(pltpu, "TPUMemorySpace")


def _round_up(x, m):
    return (x + m - 1) // m * m


def _deconv_kernel(xm_ref, xh_ref, w_ref, o_ref, *, th, wo, cin, c4, cdt):
    """One (batch, row-tile) grid step.

    xm_ref: [1, th, W+2, Cin]    main rows of the pad=1 padded NHWC input
    xh_ref: [1, 2,  W+2, Cin]    the 2 halo rows directly below them
    w_ref:  [9*Cin, 4*Cout]      scattered deconv weights, resident in VMEM
    o_ref:  [1, 1, th*W, 4*Cout] merged (dy,dx,co) sub-pixel outputs
    """
    xall = jnp.concatenate([xm_ref[0], xh_ref[0]], axis=0)   # [th+2, W+2, Cin]
    if xall.dtype != cdt:
        xall = xall.astype(cdt)

    m = th * wo
    acc = None
    for ty in range(3):                      # 9 accumulated K=Cin matmuls
        for tx in range(3):
            tap = xall[ty:ty + th, tx:tx + wo, :].reshape(m, cin)
            t = ty * 3 + tx
            wk = w_ref[t * cin:(t + 1) * cin, :]
            d = jnp.dot(tap, wk, preferred_element_type=jnp.float32)
            acc = d if acc is None else acc + d

    acc = jnp.maximum(acc, NEG_SLOPE * acc)  # fused LeakyReLU on f32 accum
    o_ref[...] = acc.reshape(o_ref.shape).astype(o_ref.dtype)


def _build_wbig(w, dtype):
    """Scatter [Cin, Cout, 4, 4] ConvTranspose2d weights into [9*Cin, 4*Cout].

    Rows = (tap_y, tap_x, ci) over the 3x3 pad=1 input window; cols =
    (dy, dx, co) over the 4 stride-2 sub-pixel positions.  For sub-position d,
    tap t = d + r (r in {0,1}) uses kernel index 3 - d - 2r.
    """
    cin, cout = w.shape[0], w.shape[1]
    w = w.astype(dtype)
    wb = jnp.zeros((3, 3, cin, 2, 2, cout), dtype=dtype)
    for dy in range(2):
        for dx in range(2):
            for ry in range(2):
                for rx in range(2):
                    ty, tx = dy + ry, dx + rx
                    ky, kx = 3 - dy - 2 * ry, 3 - dx - 2 * rx
                    wb = wb.at[ty, tx, :, dy, dx, :].set(w[:, :, ky, kx])
    return wb.reshape(9 * cin, 4 * cout)


def _vmem_budgets():
    """(tile-picker budget, scoped vmem limit) in bytes, per TPU generation."""
    cap = 64 * 1024 * 1024
    try:
        cap = int(pltpu.get_tpu_info().vmem_capacity_bytes)
    except Exception:
        pass
    if cap <= 64 * 1024 * 1024:                 # v7x-class (64 MiB per TC)
        return (min(24 * 1024 * 1024, int(cap * 0.38)),
                min(38 * 1024 * 1024, int(cap * 0.60)))
    return int(cap * 0.56), int(cap * 0.78)     # v5e / v6e (128 MiB)


def _pick_row_tile(n, h, wo, cin, c4, in_isz, out_isz, cdt_isz, budget):
    """Largest multiple-of-8 row tile whose VMEM working set fits the budget,
    capped so the grid keeps >= ~8 steps for pipelining / dual-TC sharding."""
    w2p = _round_up(wo + 2, 8)
    cinp = _round_up(cin, 128)       # native (8,128) tiling of input buffers
    c4p = _round_up(c4, 128)
    h8 = _round_up(max(h, 8), 8)
    min_rt = min(h8 // 8, -(-8 // n))

    def work(th):
        m = th * wo
        return (2 * (th + 2 + 8) * w2p * cinp * in_isz   # dbl-buf main + halo
                + 2 * m * c4p * out_isz                  # dbl-buffered output
                + _round_up(9 * cin, 8) * c4p * cdt_isz  # resident weights
                + (th + 2) * w2p * cinp * cdt_isz        # in-kernel concat
                + m * cinp * cdt_isz                     # one tap operand
                + 2 * m * c4p * 4                        # f32 accumulator
                + 2 * 1024 * 1024)                       # Mosaic scratch slack

    best = 8
    for th in range(8, h8 + 8, 8):
        rt = (h + th - 1) // th
        if th > 8 and (rt < min_rt or work(th) > budget):
            break
        best = th
    return best


@functools.partial(jax.jit, static_argnames=("compute_dtype",))
def basic_deconv(x, w, compute_dtype=None):
    """ConvTranspose2d(ks=4, stride=2, pad=1, bias=False) + LeakyReLU(0.01).

    x: [N, Cin, H, W] (NCHW, PyTorch layout); w: [Cin, Cout, 4, 4].
    Returns [N, Cout, 2H, 2W].  compute_dtype optionally sets the MXU operand
    dtype (e.g. jnp.bfloat16 on v6e/v7x); accumulation is always f32 and the
    output keeps x.dtype.
    """
    n, cin, h, wdt = x.shape
    assert w.shape[0] == cin and w.shape[2:] == (4, 4)
    cout = w.shape[1]

    in_dt = jnp.dtype(x.dtype)
    cdt = jnp.dtype(compute_dtype) if compute_dtype is not None else in_dt
    c4 = 4 * cout                               # merged (dy, dx, co) channels

    budget, vmem_limit = _vmem_budgets()
    th = _pick_row_tile(n, h, wdt, cin, c4,
                        in_dt.itemsize, in_dt.itemsize, cdt.itemsize, budget)
    rt = pl.cdiv(h, th)                         # ragged H allowed
    hp = rt * th

    # Single NCHW->NHWC layout change + pad=1 halo; rows padded up to hp+2 so
    # every tile (incl. the ragged last one) sees a full th+2-row window.
    x_nhwc = jnp.transpose(x, (0, 2, 3, 1))
    xp = jnp.pad(x_nhwc, ((0, 0), (1, hp + 1 - h), (1, 1), (0, 0)))

    wbig = _build_wbig(w, cdt)                  # [9*Cin, 4*Cout]

    kernel = functools.partial(_deconv_kernel, th=th, wo=wdt, cin=cin, c4=c4,
                               cdt=cdt)

    hlf = th // 2    # halo row-block (size 2) index: element offset (r+1)*th
    out = pl.pallas_call(
        kernel,
        out_shape=jax.ShapeDtypeStruct((n, rt, th * wdt, c4), in_dt),
        grid=(n, rt),
        in_specs=[
            # th "main" padded-input rows of tile r ...
            pl.BlockSpec((1, th, wdt + 2, cin), lambda i, r: (i, r, 0, 0)),
            # ... plus the 2 halo rows right below them (same HBM array).
            pl.BlockSpec((1, 2, wdt + 2, cin),
                         lambda i, r: (i, (r + 1) * hlf, 0, 0)),
            # Weights resident once in VMEM (no double-buffering).
            pl.BlockSpec(memory_space=_MS.VMEM),
        ],
        out_specs=pl.BlockSpec((1, 1, th * wdt, c4), lambda i, r: (i, r, 0, 0)),
        compiler_params=pltpu.CompilerParams(
            dimension_semantics=("parallel", "parallel"),
            vmem_limit_bytes=vmem_limit,
        ),
    )(xp, xp, wbig)

    # Drop padded rows, de-interleave the 4 sub-pixels and return to NCHW in
    # one fused output transform.
    o = out.reshape(n, hp, wdt, 2, 2, cout)[:, :h]
    y = jnp.transpose(o, (0, 5, 1, 3, 2, 4)).reshape(n, cout, 2 * h, 2 * wdt)
    return y


def _reference(x, w):
    """Pure-JAX ConvTranspose2d(ks=4, s=2, p=1) + LeakyReLU, for validation."""
    w_conv = jnp.transpose(w[:, :, ::-1, ::-1], (1, 0, 2, 3))  # [Cout,Cin,4,4]
    y = jax.lax.conv_general_dilated(
        x, w_conv,
        window_strides=(1, 1),
        padding=((2, 2), (2, 2)),
        lhs_dilation=(2, 2),
        dimension_numbers=("NCHW", "OIHW", "NCHW"),
        precision=jax.lax.Precision.HIGHEST)
    return jnp.where(y >= 0, y, NEG_SLOPE * y)


if __name__ == "__main__":
    key = jax.random.PRNGKey(0)
    kx, kw = jax.random.split(key)
    n, cin, cout, h, wsp = 2, 4, 8, 16, 16
    x = jax.random.normal(kx, (n, cin, h, wsp), dtype=jnp.float32)
    wt = jax.random.normal(kw, (cin, cout, 4, 4), dtype=jnp.float32) * 0.1

    # f32 path.
    y = jax.block_until_ready(basic_deconv(x, wt))
    assert y.shape == (n, cout, 2 * h, 2 * wsp), y.shape
    y_ref = _reference(x, wt)
    err = float(jnp.max(jnp.abs(y - y_ref)))
    assert err < 1e-2, f"f32 path: max abs error vs reference: {err}"

    # Ragged-H path (H not a multiple of the row tile).
    x2 = jax.random.normal(kx, (1, cin, 20, wsp), dtype=jnp.float32)
    y2 = jax.block_until_ready(basic_deconv(x2, wt))
    err2 = float(jnp.max(jnp.abs(y2 - _reference(x2, wt))))
    assert err2 < 1e-2, f"ragged-H path: max abs error vs reference: {err2}"

    # bf16 MXU-operand fast path (f32 accumulation), looser tolerance.
    y3 = jax.block_until_ready(basic_deconv(x, wt, compute_dtype=jnp.bfloat16))
    err3 = float(jnp.max(jnp.abs(y3 - y_ref)))
    assert err3 < 5e-2, f"bf16 path: max abs error vs reference: {err3}"

    print("KERNEL_OK")
</pallas_src>

<mosaic_0001>
module attributes {stable_mosaic.version = 11 : i64} {
  func.func @_deconv_kernel(%arg0: i32, %arg1: i32, %arg2: memref<1x8x18x4xf32, #tpu.memory_space<vmem>>, %arg3: memref<1x2x18x4xf32, #tpu.memory_space<vmem>>, %arg4: memref<36x32xf32, #tpu.memory_space<vmem>>, %arg5: memref<1x1x128x32xf32, #tpu.memory_space<vmem>>) attributes {dimension_semantics = [#tpu.dimension_semantics<parallel>, #tpu.dimension_semantics<parallel>], iteration_bounds = array<i64: 2, 2>, scalar_prefetch = 0 : i64, scratch_operands = 0 : i64, tpu.core_type = #tpu.core_type<tc>, window_params = [{transform_indices = @transform_0, window_bounds = array<i64: 1, 8, 18, 4>}, {transform_indices = @transform_1, window_bounds = array<i64: 1, 2, 18, 4>}, {pipeline_mode = #tpu.pipeline_mode<synchronous>, transform_indices = @transform_2, window_bounds = array<i64: 36, 32>}, {transform_indices = @transform_3, window_bounds = array<i64: 1, 1, 128, 32>}]} {
    %c0 = arith.constant 0 : index
    %c0_0 = arith.constant 0 : index
    %c0_1 = arith.constant 0 : index
    %c0_2 = arith.constant 0 : index
    %0 = vector.load %arg2[%c0, %c0_0, %c0_1, %c0_2] : memref<1x8x18x4xf32, #tpu.memory_space<vmem>>, vector<1x8x18x4xf32>
    %1 = vector.shape_cast %0 : vector<1x8x18x4xf32> to vector<8x18x4xf32>
    %c0_3 = arith.constant 0 : index
    %c0_4 = arith.constant 0 : index
    %c0_5 = arith.constant 0 : index
    %c0_6 = arith.constant 0 : index
    %2 = vector.load %arg3[%c0_3, %c0_4, %c0_5, %c0_6] : memref<1x2x18x4xf32, #tpu.memory_space<vmem>>, vector<1x2x18x4xf32>
    %3 = vector.shape_cast %2 : vector<1x2x18x4xf32> to vector<2x18x4xf32>
    %4 = tpu.concatenate %1, %3 in 0 : vector<8x18x4xf32>, vector<2x18x4xf32> -> vector<10x18x4xf32>
    %5 = vector.extract_strided_slice %4 {offsets = [0, 0, 0], sizes = [8, 16, 4], strides = [1, 1, 1]} : vector<10x18x4xf32> to vector<8x16x4xf32>
    %6 = vector.shape_cast %5 : vector<8x16x4xf32> to vector<128x4xf32>
    %c0_7 = arith.constant 0 : index
    %c0_8 = arith.constant 0 : index
    %7 = vector.load %arg4[%c0_7, %c0_8] : memref<36x32xf32, #tpu.memory_space<vmem>>, vector<4x32xf32>
    %cst = arith.constant dense<0.000000e+00> : vector<128x32xf32>
    %8 = tpu.matmul %6, %7, %cst {dimension_numbers = #tpu.dot_dimension_numbers<[1], [0], [0], [1], [0, 0, 1, 1], [], []>} : vector<128x4xf32>, vector<4x32xf32>, vector<128x32xf32> -> vector<128x32xf32>
    %9 = vector.extract_strided_slice %4 {offsets = [0, 1, 0], sizes = [8, 16, 4], strides = [1, 1, 1]} : vector<10x18x4xf32> to vector<8x16x4xf32>
    %10 = vector.shape_cast %9 : vector<8x16x4xf32> to vector<128x4xf32>
    %c4 = arith.constant 4 : index
    %c0_9 = arith.constant 0 : index
    %11 = vector.load %arg4[%c4, %c0_9] : memref<36x32xf32, #tpu.memory_space<vmem>>, vector<4x32xf32>
    %cst_10 = arith.constant dense<0.000000e+00> : vector<128x32xf32>
    %12 = tpu.matmul %10, %11, %cst_10 {dimension_numbers = #tpu.dot_dimension_numbers<[1], [0], [0], [1], [0, 0, 1, 1], [], []>} : vector<128x4xf32>, vector<4x32xf32>, vector<128x32xf32> -> vector<128x32xf32>
    %13 = arith.addf %8, %12 : vector<128x32xf32>
    %14 = vector.extract_strided_slice %4 {offsets = [0, 2, 0], sizes = [8, 16, 4], strides = [1, 1, 1]} : vector<10x18x4xf32> to vector<8x16x4xf32>
    %15 = vector.shape_cast %14 : vector<8x16x4xf32> to vector<128x4xf32>
    %c8 = arith.constant 8 : index
    %c0_11 = arith.constant 0 : index
    %16 = vector.load %arg4[%c8, %c0_11] : memref<36x32xf32, #tpu.memory_space<vmem>>, vector<4x32xf32>
    %cst_12 = arith.constant dense<0.000000e+00> : vector<128x32xf32>
    %17 = tpu.matmul %15, %16, %cst_12 {dimension_numbers = #tpu.dot_dimension_numbers<[1], [0], [0], [1], [0, 0, 1, 1], [], []>} : vector<128x4xf32>, vector<4x32xf32>, vector<128x32xf32> -> vector<128x32xf32>
    %18 = arith.addf %13, %17 : vector<128x32xf32>
    %19 = vector.extract_strided_slice %4 {offsets = [1, 0, 0], sizes = [8, 16, 4], strides = [1, 1, 1]} : vector<10x18x4xf32> to vector<8x16x4xf32>
    %20 = vector.shape_cast %19 : vector<8x16x4xf32> to vector<128x4xf32>
    %c12 = arith.constant 12 : index
    %c0_13 = arith.constant 0 : index
    %21 = vector.load %arg4[%c12, %c0_13] : memref<36x32xf32, #tpu.memory_space<vmem>>, vector<4x32xf32>
    %cst_14 = arith.constant dense<0.000000e+00> : vector<128x32xf32>
    %22 = tpu.matmul %20, %21, %cst_14 {dimension_numbers = #tpu.dot_dimension_numbers<[1], [0], [0], [1], [0, 0, 1, 1], [], []>} : vector<128x4xf32>, vector<4x32xf32>, vector<128x32xf32> -> vector<128x32xf32>
    %23 = arith.addf %18, %22 : vector<128x32xf32>
    %24 = vector.extract_strided_slice %4 {offsets = [1, 1, 0], sizes = [8, 16, 4], strides = [1, 1, 1]} : vector<10x18x4xf32> to vector<8x16x4xf32>
    %25 = vector.shape_cast %24 : vector<8x16x4xf32> to vector<128x4xf32>
    %c16 = arith.constant 16 : index
    %c0_15 = arith.constant 0 : index
    %26 = vector.load %arg4[%c16, %c0_15] : memref<36x32xf32, #tpu.memory_space<vmem>>, vector<4x32xf32>
    %cst_16 = arith.constant dense<0.000000e+00> : vector<128x32xf32>
    %27 = tpu.matmul %25, %26, %cst_16 {dimension_numbers = #tpu.dot_dimension_numbers<[1], [0], [0], [1], [0, 0, 1, 1], [], []>} : vector<128x4xf32>, vector<4x32xf32>, vector<128x32xf32> -> vector<128x32xf32>
    %28 = arith.addf %23, %27 : vector<128x32xf32>
    %29 = vector.extract_strided_slice %4 {offsets = [1, 2, 0], sizes = [8, 16, 4], strides = [1, 1, 1]} : vector<10x18x4xf32> to vector<8x16x4xf32>
    %30 = vector.shape_cast %29 : vector<8x16x4xf32> to vector<128x4xf32>
    %c20 = arith.constant 20 : index
    %c0_17 = arith.constant 0 : index
    %31 = vector.load %arg4[%c20, %c0_17] : memref<36x32xf32, #tpu.memory_space<vmem>>, vector<4x32xf32>
    %cst_18 = arith.constant dense<0.000000e+00> : vector<128x32xf32>
    %32 = tpu.matmul %30, %31, %cst_18 {dimension_numbers = #tpu.dot_dimension_numbers<[1], [0], [0], [1], [0, 0, 1, 1], [], []>} : vector<128x4xf32>, vector<4x32xf32>, vector<128x32xf32> -> vector<128x32xf32>
    %33 = arith.addf %28, %32 : vector<128x32xf32>
    %34 = vector.extract_strided_slice %4 {offsets = [2, 0, 0], sizes = [8, 16, 4], strides = [1, 1, 1]} : vector<10x18x4xf32> to vector<8x16x4xf32>
    %35 = vector.shape_cast %34 : vector<8x16x4xf32> to vector<128x4xf32>
    %c24 = arith.constant 24 : index
    %c0_19 = arith.constant 0 : index
    %36 = vector.load %arg4[%c24, %c0_19] : memref<36x32xf32, #tpu.memory_space<vmem>>, vector<4x32xf32>
    %cst_20 = arith.constant dense<0.000000e+00> : vector<128x32xf32>
    %37 = tpu.matmul %35, %36, %cst_20 {dimension_numbers = #tpu.dot_dimension_numbers<[1], [0], [0], [1], [0, 0, 1, 1], [], []>} : vector<128x4xf32>, vector<4x32xf32>, vector<128x32xf32> -> vector<128x32xf32>
    %38 = arith.addf %33, %37 : vector<128x32xf32>
    %39 = vector.extract_strided_slice %4 {offsets = [2, 1, 0], sizes = [8, 16, 4], strides = [1, 1, 1]} : vector<10x18x4xf32> to vector<8x16x4xf32>
    %40 = vector.shape_cast %39 : vector<8x16x4xf32> to vector<128x4xf32>
    %c28 = arith.constant 28 : index
    %c0_21 = arith.constant 0 : index
    %41 = vector.load %arg4[%c28, %c0_21] : memref<36x32xf32, #tpu.memory_space<vmem>>, vector<4x32xf32>
    %cst_22 = arith.constant dense<0.000000e+00> : vector<128x32xf32>
    %42 = tpu.matmul %40, %41, %cst_22 {dimension_numbers = #tpu.dot_dimension_numbers<[1], [0], [0], [1], [0, 0, 1, 1], [], []>} : vector<128x4xf32>, vector<4x32xf32>, vector<128x32xf32> -> vector<128x32xf32>
    %43 = arith.addf %38, %42 : vector<128x32xf32>
    %44 = vector.extract_strided_slice %4 {offsets = [2, 2, 0], sizes = [8, 16, 4], strides = [1, 1, 1]} : vector<10x18x4xf32> to vector<8x16x4xf32>
    %45 = vector.shape_cast %44 : vector<8x16x4xf32> to vector<128x4xf32>
    %c32 = arith.constant 32 : index
    %c0_23 = arith.constant 0 : index
    %46 = vector.load %arg4[%c32, %c0_23] : memref<36x32xf32, #tpu.memory_space<vmem>>, vector<4x32xf32>
    %cst_24 = arith.constant dense<0.000000e+00> : vector<128x32xf32>
    %47 = tpu.matmul %45, %46, %cst_24 {dimension_numbers = #tpu.dot_dimension_numbers<[1], [0], [0], [1], [0, 0, 1, 1], [], []>} : vector<128x4xf32>, vector<4x32xf32>, vector<128x32xf32> -> vector<128x32xf32>
    %48 = arith.addf %43, %47 : vector<128x32xf32>
    %cst_25 = arith.constant 0.00999999977 : f32
    %49 = vector.broadcast %cst_25 : f32 to vector<128x32xf32>
    %50 = arith.mulf %49, %48 : vector<128x32xf32>
    %51 = arith.maximumf %48, %50 : vector<128x32xf32>
    %52 = vector.shape_cast %51 : vector<128x32xf32> to vector<1x1x128x32xf32>
    %c0_26 = arith.constant 0 : index
    %c0_27 = arith.constant 0 : index
    %c0_28 = arith.constant 0 : index
    %c0_29 = arith.constant 0 : index
    %53 = vector.load %arg5[%c0_26, %c0_27, %c0_28, %c0_29] : memref<1x1x128x32xf32, #tpu.memory_space<vmem>>, vector<1x1x128x32xf32>
    tpu.vector_store %arg5[%c0_26, %c0_27, %c0_28, %c0_29], %52 {strides = array<i32>} : memref<1x1x128x32xf32, #tpu.memory_space<vmem>>, vector<1x1x128x32xf32>,
    return
  }
  func.func @transform_0(%arg0: i32, %arg1: i32) -> (i32, i32, i32, i32) {
    %c0_i32 = arith.constant 0 : i32
    %c0_i32_0 = arith.constant 0 : i32
    %c0_i32_1 = arith.constant 0 : i32
    return %arg0, %arg1, %c0_i32, %c0_i32_0 : i32, i32, i32, i32
  }
  func.func @transform_1(%arg0: i32, %arg1: i32) -> (i32, i32, i32, i32) {
    %c1_i32 = arith.constant 1 : i32
    %0 = arith.addi %arg1, %c1_i32 : i32
    %c4_i32 = arith.constant 4 : i32
    %1 = arith.muli %0, %c4_i32 : i32
    %c0_i32 = arith.constant 0 : i32
    %c0_i32_0 = arith.constant 0 : i32
    %c0_i32_1 = arith.constant 0 : i32
    return %arg0, %1, %c0_i32, %c0_i32_0 : i32, i32, i32, i32
  }
  func.func @transform_2(%arg0: i32, %arg1: i32) -> (i32, i32) {
    %c0_i32 = arith.constant 0 : i32
    %c0_i32_0 = arith.constant 0 : i32
    %c0_i32_1 = arith.constant 0 : i32
    return %c0_i32, %c0_i32_0 : i32, i32
  }
  func.func @transform_3(%arg0: i32, %arg1: i32) -> (i32, i32, i32, i32) {
    %c0_i32 = arith.constant 0 : i32
    %c0_i32_0 = arith.constant 0 : i32
    %c0_i32_1 = arith.constant 0 : i32
    return %arg0, %arg1, %c0_i32, %c0_i32_0 : i32, i32, i32, i32
  }
}

</mosaic_0001>

<llo_original>
// kernel: basic_deconv.1
$region0: #{basic_deconv.1}
  #allocation0 [shape = 'u32[]', space=smem, size = 0x4, offset = 0x4, fixed_abs, tag = 'smem constant byte address 0x4 - core index']
  #allocation1 [shape = 'u32[144,128]{1,0:T(1,128)}', space=vmem, size = 0x12000, scoped, tag = 'internal scratch']
  %s0 = inlined_call_operand.vmem [shape: f32[2,18,18,4], index: 0, kind: input, shape index: {}, may-alias: {0,1}]
  %s1 = inlined_call_operand.vmem [shape: f32[2,18,18,4], index: 1, kind: input, shape index: {}, may-alias: {0,1}]
  %s2 = inlined_call_operand.vmem [shape: f32[36,32], index: 2, kind: input, shape index: {}]
  %s3 = inlined_call_operand.vmem [shape: f32[2,2,128,32], index: 3, kind: output, shape index: {}]
  %s4 = sld [smem:[#allocation0]]
  $region45: #{basic_deconv.1} parent=0
    _
  %s6 = ssub.s32 1, %s4
  %s7 = scalar_select 0, %s6, %s4
  loop: start=0, step=1, limit=6
  $region2: #{basic_deconv.1} parent=0 // loop_pre_header
    _
  $region3: #{basic_deconv.1} parent=0 // loop_header
    %s9 = sphi 0, %s13
    %p10 = scmp.ge.s32.totalorder %s9, 6
    %s16 = sphi 0, %s28
    %s17 = sphi 0, %s24
    %s18 = sphi 0, %s16
    %s19 = sphi 0, %s17
    %s20 = sphi 0, %s18
    %s21 = sphi 0, %s19
    %s33 = sphi 0, %s35
    %s36 = sphi 0, %s33
    %s37 = sphi 0, %s36
    %s53 = sphi 0, %s37
    %s65 = sphi 0, %s67
    %s68 = sphi 0, %s65
    %s69 = sphi 0, %s68
    %s85 = sphi 0, %s69
    %s89 = sphi 0, %s89
    %s91 = sphi 0, %s89
    %s92 = sphi 0, %s91
    %s106 = sphi 0, %s92
    %s114 = sphi 0, %s116
    %s117 = sphi 0, %s114
    %s118 = sphi 0, %s117
    %s134 = sphi 0, %s118
  $region4: #{basic_deconv.1} parent=0 // loop_header_branch
    %12 = sbr.rel (%p10) target = $region8
  $region5: #{basic_deconv.1} parent=0 // loop_body
    %s14 = ssub.s32 %s9, 1
    %s15 = ssub.s32 %s9, 2
    %s22 = sadd.s32 1, %s17
    %p23 = scmp.ge.s32.totalorder %s22, 2
    %s24 = scalar_select %p23, 0, %s22
    %s25 = sadd.s32 1, %s16
    %s26 = scalar_select %p23, %s25, %s16
    %p27 = scmp.ge.s32.totalorder %s26, 2
    %s28 = scalar_select %p27, 0, %s26
    %s29 = ssub.s32 %s16, %s28
    %s30 = ssub.s32 %s17, %s24
    %s31 = sor.u32 %s29, %s30
    %p32 = scmp.eq.s32.totalorder %s31, 0
    %s34 = sadd.s32 %s33, 1
    %s35 = scalar_select %p32, %s33, %s34
    %p38 = pneg %p32
    %p39 = scmp.eq.s32.totalorder %s9, 3
    %p40 = por %p38, %p39
    %p41 = scmp.ne.s32.totalorder %s33, %s36
    %p42 = scmp.eq.s32.totalorder %s9, 0
    %p43 = por %p41, %p42
    %p44 = scmp.ne.s32.totalorder %s33, %s36
    %p45 = scmp.eq.s32.totalorder %s14, 3
    %p46 = por %p44, %p45
    %p47 = scmp.ne.s32.totalorder %s36, %s37
    %p48 = scmp.eq.s32.totalorder %s14, 0
    %p49 = por %p47, %p48
    %p50 = scmp.ne.s32.totalorder %s36, %s37
    %p51 = scmp.eq.s32.totalorder %s15, 3
    %p52 = por %p50, %p51
    %p54 = scmp.ne.s32.totalorder %s37, %s53
    %p55 = scmp.eq.s32.totalorder %s15, 0
    %p56 = por %p54, %p55
    %s57 = sadd.s32 %s17, 1
    %s58 = smul.u32 %s57, 4
    %s59 = sadd.s32 %s24, 1
    %s60 = smul.u32 %s59, 4
    %s61 = ssub.s32 %s16, %s28
    %s62 = ssub.s32 %s58, %s60
    %s63 = sor.u32 %s61, %s62
    %p64 = scmp.eq.s32.totalorder %s63, 0
    %s66 = sadd.s32 %s65, 1
    %s67 = scalar_select %p64, %s65, %s66
    %p70 = pneg %p64
    %p71 = scmp.eq.s32.totalorder %s9, 3
    %p72 = por %p70, %p71
    %p73 = scmp.ne.s32.totalorder %s65, %s68
    %p74 = scmp.eq.s32.totalorder %s9, 0
    %p75 = por %p73, %p74
    %p76 = scmp.ne.s32.totalorder %s65, %s68
    %p77 = scmp.eq.s32.totalorder %s14, 3
    %p78 = por %p76, %p77
    %p79 = scmp.ne.s32.totalorder %s68, %s69
    %p80 = scmp.eq.s32.totalorder %s14, 0
    %p81 = por %p79, %p80
    %p82 = scmp.ne.s32.totalorder %s68, %s69
    %p83 = scmp.eq.s32.totalorder %s15, 3
    %p84 = por %p82, %p83
    %p86 = scmp.ne.s32.totalorder %s69, %s85
    %p87 = scmp.eq.s32.totalorder %s15, 0
    %p88 = por %p86, %p87
    %s90 = sadd.s32 %s89, 1
    %p93 = scmp.eq.s32.totalorder %s9, 3
    %p94 = scmp.ne.s32.totalorder %s89, %s91
    %p95 = scmp.eq.s32.totalorder %s9, 0
    %p96 = por %p94, %p95
    %p97 = scmp.ne.s32.totalorder %s89, %s91
    %p98 = scmp.eq.s32.totalorder %s14, 3
    %p99 = por %p97, %p98
    %p100 = scmp.ne.s32.totalorder %s91, %s92
    %p101 = scmp.eq.s32.totalorder %s14, 0
    %p102 = por %p100, %p101
    %p103 = scmp.ne.s32.totalorder %s91, %s92
    %p104 = scmp.eq.s32.totalorder %s15, 3
    %p105 = por %p103, %p104
    %p107 = scmp.ne.s32.totalorder %s92, %s106
    %p108 = scmp.eq.s32.totalorder %s15, 0
    %p109 = por %p107, %p108
    %s110 = ssub.s32 %s16, %s28
    %s111 = ssub.s32 %s17, %s24
    %s112 = sor.u32 %s110, %s111
    %p113 = scmp.eq.s32.totalorder %s112, 0
    %s115 = sadd.s32 %s114, 1
    %s116 = scalar_select %p113, %s114, %s115
    %p119 = pneg %p113
    %p120 = scmp.eq.s32.totalorder %s9, 3
    %p121 = por %p119, %p120
    %p122 = scmp.ne.s32.totalorder %s114, %s117
    %p123 = scmp.eq.s32.totalorder %s9, 0
    %p124 = por %p122, %p123
    %p125 = scmp.ne.s32.totalorder %s114, %s117
    %p126 = scmp.eq.s32.totalorder %s14, 3
    %p127 = por %p125, %p126
    %p128 = scmp.ne.s32.totalorder %s117, %s118
    %p129 = scmp.eq.s32.totalorder %s14, 0
    %p130 = por %p128, %p129
    %p131 = scmp.ne.s32.totalorder %s117, %s118
    %p132 = scmp.eq.s32.totalorder %s15, 3
    %p133 = por %p131, %p132
    %p135 = scmp.ne.s32.totalorder %s118, %s134
    %p136 = scmp.eq.s32.totalorder %s15, 0
    %p137 = por %p135, %p136
    %p138 = scmp.le.s32.totalorder 1, %s9
    %p139 = scmp.lt.s32.totalorder %s9, 5
    %p140 = pnand %p138, %p139
    %p141 = pneg %p140
    // Predicated region
    $region9: #{basic_deconv.1} parent=5 // pred_check
      _
    $region10: #{basic_deconv.1} parent=5 // pred_check_branch
      %143 = sbr.rel (%p140) target = $region12
    $region11: #{basic_deconv.1} parent=5 // pred_region
      %s144 = ssub.s32 %s9, 1
      // Predicated region
      $region13: #{basic_deconv.1} parent=11 // pred_check
        %p145 = pneg %p102
      $region14: #{basic_deconv.1} parent=11 // pred_check_branch
        %147 = sbr.rel (%p145) target = $region16
      $region15: #{basic_deconv.1} parent=11 // pred_region
        _
      $region16: #{basic_deconv.1} parent=11 // pred_fallthru
        _
    $region12: #{basic_deconv.1} parent=5 // pred_fallthru
      _
    %p148 = scmp.lt.s32.totalorder %s9, 4
    // Predicated region
    $region17: #{basic_deconv.1} parent=5 // pred_check
      %p149 = pneg %p148
    $region18: #{basic_deconv.1} parent=5 // pred_check_branch
      %151 = sbr.rel (%p149) target = $region20
    $region19: #{basic_deconv.1} parent=5 // pred_region
      // Predicated region
      $region21: #{basic_deconv.1} parent=19 // pred_check
        %p152 = pneg %p43
      $region22: #{basic_deconv.1} parent=19 // pred_check_branch
        %154 = sbr.rel (%p152) target = $region24
      $region23: #{basic_deconv.1} parent=19 // pred_region
        %s155 = smul.u32 8, %s17
        %s156 = ssub.s32 18, %s155
        %p157 = scmp.lt.s32.totalorder %s156, 8
        %s158 = scalar_select %p157, %s156, 8
        %s159 = smul.u32 128, %s158
        %s160 = smul.u32 %s159, 3
        %p161 = scmp.lt.s32.totalorder %s16, 1
        %s162 = scalar_select %p161, %s16, 1
        %p163 = scmp.lt.s32.totalorder %s155, 17
        %s164 = scalar_select %p163, %s155, 17
        %s165 = smul.addr %s164, 3
        %s166 = smul.addr %s162, 54
        %s167 = sadd.s32 %s165, %s166
        %s168 = smul.addr %s167, 8
        %s169 = scalar_lea.vmem %s0, %s168
        %s170 = smul.u32 8, %s17
        %s171 = ssub.s32 18, %s170
        %p172 = scmp.lt.s32.totalorder %s171, 8
        %s173 = scalar_select %p172, %s171, 8
        %s174 = smul.u32 128, %s173
        %s175 = smul.u32 %s174, 3
      $region24: #{basic_deconv.1} parent=19 // pred_fallthru
        _
      // Predicated region
      $region25: #{basic_deconv.1} parent=19 // pred_check
        %p176 = pneg %p75
      $region26: #{basic_deconv.1} parent=19 // pred_check_branch
        %178 = sbr.rel (%p176) target = $region28
      $region27: #{basic_deconv.1} parent=19 // pred_region
        %s179 = sadd.s32 %s17, 1
        %s180 = smul.u32 %s179, 4
        %s181 = smul.u32 2, %s180
        %p182 = scmp.lt.s32.totalorder %s16, 1
        %s183 = scalar_select %p182, %s16, 1
        %p184 = scmp.lt.s32.totalorder %s181, 17
        %s185 = scalar_select %p184, %s181, 17
        %s186 = smul.addr %s185, 3
        %s187 = smul.addr %s183, 54
        %s188 = sadd.s32 %s186, %s187
        %s189 = smul.addr %s188, 8
        %s190 = scalar_lea.vmem %s1, %s189
        %s191 = sadd.s32 %s17, 1
        %s192 = smul.u32 %s191, 4
        %s193 = smul.u32 2, %s192
      $region28: #{basic_deconv.1} parent=19 // pred_fallthru
        _
    $region20: #{basic_deconv.1} parent=5 // pred_fallthru
      _
    %p194 = scmp.le.s32.totalorder 1, %s9
    %p195 = scmp.lt.s32.totalorder %s9, 5
    %p196 = pnand %p194, %p195
    %p197 = pneg %p196
    // Predicated region
    $region29: #{basic_deconv.1} parent=5 // pred_check
      _
    $region30: #{basic_deconv.1} parent=5 // pred_check_branch
      %199 = sbr.rel (%p196) target = $region32
    $region31: #{basic_deconv.1} parent=5 // pred_region
      %s200 = ssub.s32 %s9, 1
      %s201 = smul.u32 8, %s19
      %s202 = ssub.s32 18, %s201
      %p203 = scmp.lt.s32.totalorder %s202, 8
      %s204 = scalar_select %p203, %s202, 8
      %s205 = smul.u32 128, %s204
      %s206 = smul.u32 %s205, 3
      %p207 = scmp.lt.s32.totalorder %s18, 1
      %s208 = scalar_select %p207, %s18, 1
      %p209 = scmp.lt.s32.totalorder %s201, 17
      %s210 = scalar_select %p209, %s201, 17
      %s211 = smul.addr %s210, 3
      %s212 = smul.addr %s208, 54
      %s213 = sadd.s32 %s211, %s212
      %s214 = smul.addr %s213, 8
      %s215 = scalar_lea.vmem %s0, %s214
      %p216 = pneg %p49
      %p217 = pneg %p46
      %s218 = sadd.s32 %s19, 1
      %s219 = smul.u32 %s218, 4
      %s220 = smul.u32 2, %s219
      %p221 = scmp.lt.s32.totalorder %s18, 1
      %s222 = scalar_select %p221, %s18, 1
      %p223 = scmp.lt.s32.totalorder %s220, 17
      %s224 = scalar_select %p223, %s220, 17
      %s225 = smul.addr %s224, 3
      %s226 = smul.addr %s222, 54
      %s227 = sadd.s32 %s225, %s226
      %s228 = smul.addr %s227, 8
      %s229 = scalar_lea.vmem %s1, %s228
      %p230 = pneg %p81
      %p231 = pneg %p78
      %p232 = pneg %p102
      %p233 = pneg %p99
      %p234 = pneg %p130
      %p235 = pneg %p127
      %p236 = scmp.lt.s32.totalorder %s18, 1
      %s237 = scalar_select %p236, %s18, 1
      %p238 = scmp.lt.s32.totalorder %s19, 1
      %s239 = scalar_select %p238, %s19, 1
      %s240 = smul.addr %s239, 16
      %s241 = smul.addr %s237, 32
      %s242 = sadd.s32 %s240, %s241
      %s243 = smul.addr %s242, 8
      %s244 = scalar_lea.vmem %s3, %s243
      %s245 = smul.u32 8, %s19
      %s246 = ssub.s32 18, %s245
      %p247 = scmp.lt.s32.totalorder %s246, 8
      %s248 = scalar_select %p247, %s246, 8
      %s249 = smul.u32 128, %s248
      %s250 = smul.u32 %s249, 3
      %p251 = scmp.lt.s32.totalorder %s18, 1
      %s252 = scalar_select %p251, %s18, 1
      %p253 = scmp.lt.s32.totalorder %s245, 17
      %s254 = scalar_select %p253, %s245, 17
      %s255 = smul.addr %s254, 3
      %s256 = smul.addr %s252, 54
      %s257 = sadd.s32 %s255, %s256
      %s258 = smul.addr %s257, 8
      %s259 = scalar_lea.vmem %s0, %s258
      %s260 = smul.u32 8, %s19
      %s261 = ssub.s32 18, %s260
      %p262 = scmp.lt.s32.totalorder %s261, 8
      %s263 = scalar_select %p262, %s261, 8
      %s264 = smul.u32 128, %s263
      %s265 = smul.u32 %s264, 3
      %s266 = sadd.s32 %s19, 1
      %s267 = smul.u32 %s266, 4
      %s268 = smul.u32 2, %s267
      %p269 = scmp.lt.s32.totalorder %s18, 1
      %s270 = scalar_select %p269, %s18, 1
      %p271 = scmp.lt.s32.totalorder %s268, 17
      %s272 = scalar_select %p271, %s268, 17
      %s273 = smul.addr %s272, 3
      %s274 = smul.addr %s270, 54
      %s275 = sadd.s32 %s273, %s274
      %s276 = smul.addr %s275, 8
      %s277 = scalar_lea.vmem %s1, %s276
      %s278 = sadd.s32 %s19, 1
      %s279 = smul.u32 %s278, 4
      %s280 = smul.u32 2, %s279
      %p281 = scmp.lt.s32.totalorder %s18, 1
      %s282 = scalar_select %p281, %s18, 1
      %p283 = scmp.lt.s32.totalorder %s19, 1
      %s284 = scalar_select %p283, %s19, 1
      %s285 = smul.addr %s284, 16
      %s286 = smul.addr %s282, 32
      %s287 = sadd.s32 %s285, %s286
      %s288 = smul.addr %s287, 8
      %s289 = scalar_lea.vmem %s3, %s288
      %v290 = vld [vmem:[%s259] sm:$0xff]
      %v291 = vld [vmem:[%s259 + $0x8] sm:$0xff]
      %v292 = vld [vmem:[%s259 + $0x10] sm:$0x3]
      %v293 = vld [vmem:[%s259 + $0x18] sm:$0xff]
      %v294 = vld [vmem:[%s259 + $0x20] sm:$0xff]
      %v295 = vld [vmem:[%s259 + $0x28] sm:$0x3]
      %v296 = vld [vmem:[%s259 + $0x30] sm:$0xff]
      %v297 = vld [vmem:[%s259 + $0x38] sm:$0xff]
      %v298 = vld [vmem:[%s259 + $0x40] sm:$0x3]
      %v299 = vld [vmem:[%s259 + $0x48] sm:$0xff]
      %v300 = vld [vmem:[%s259 + $0x50] sm:$0xff]
      %v301 = vld [vmem:[%s259 + $0x58] sm:$0x3]
      %v302 = vld [vmem:[%s259 + $0x60] sm:$0xff]
      %v303 = vld [vmem:[%s259 + $0x68] sm:$0xff]
      %v304 = vld [vmem:[%s259 + $0x70] sm:$0x3]
      %v305 = vld [vmem:[%s259 + $0x78] sm:$0xff]
      %v306 = vld [vmem:[%s259 + $0x80] sm:$0xff]
      %v307 = vld [vmem:[%s259 + $0x88] sm:$0x3]
      %v308 = vld [vmem:[%s259 + $0x90] sm:$0xff]
      %v309 = vld [vmem:[%s259 + $0x98] sm:$0xff]
      %v310 = vld [vmem:[%s259 + $0xa0] sm:$0x3]
      %v311 = vld [vmem:[%s259 + $0xa8] sm:$0xff]
      %v312 = vld [vmem:[%s259 + $0xb0] sm:$0xff]
      %v313 = vld [vmem:[%s259 + $0xb8] sm:$0x3]
      %v314 = vld [vmem:[%s277] sm:$0xff]
      %v315 = vld [vmem:[%s277 + $0x8] sm:$0xff]
      %v316 = vld [vmem:[%s277 + $0x10] sm:$0x3]
      %v317 = vld [vmem:[%s277 + $0x18] sm:$0xff]
      %v318 = vld [vmem:[%s277 + $0x20] sm:$0xff]
      %v319 = vld [vmem:[%s277 + $0x28] sm:$0x3]
      %v320 = vld [vmem:[%s2] sm:$0xf]
      %vm345 = vcmask 1046528
      %v346 = vrot.slane %v290, 1
      %v347 = vrot.slane %v291, 1
      %v348 = vsel %vm345, %v346, %v347
      %v349 = vrot.slane %v292, 1
      %v350 = vsel %vm345, %v347, %v349
      %v351 = vrot.slane %v293, 1
      %v352 = vrot.slane %v294, 1
      %v353 = vsel %vm345, %v351, %v352
      %v354 = vrot.slane %v295, 1
      %v355 = vsel %vm345, %v352, %v354
      %v356 = vrot.slane %v296, 1
      %v357 = vrot.slane %v297, 1
      %v358 = vsel %vm345, %v356, %v357
      %v359 = vrot.slane %v298, 1
      %v360 = vsel %vm345, %v357, %v359
      %v361 = vrot.slane %v299, 1
      %v362 = vrot.slane %v300, 1
      %v363 = vsel %vm345, %v361, %v362
      %v364 = vrot.slane %v301, 1
      %v365 = vsel %vm345, %v362, %v364
      %v366 = vrot.slane %v302, 1
      %v367 = vrot.slane %v303, 1
      %v368 = vsel %vm345, %v366, %v367
      %v369 = vrot.slane %v304, 1
      %v370 = vsel %vm345, %v367, %v369
      %v371 = vrot.slane %v305, 1
      %v372 = vrot.slane %v306, 1
      %v373 = vsel %vm345, %v371, %v372
      %v374 = vrot.slane %v307, 1
      %v375 = vsel %vm345, %v372, %v374
      %v376 = vrot.slane %v308, 1
      %v377 = vrot.slane %v309, 1
      %v378 = vsel %vm345, %v376, %v377
      %v379 = vrot.slane %v310, 1
      %v380 = vsel %vm345, %v377, %v379
      %v381 = vrot.slane %v311, 1
      %v382 = vrot.slane %v312, 1
      %v383 = vsel %vm345, %v381, %v382
      %v384 = vrot.slane %v313, 1
      %v385 = vsel %vm345, %v382, %v384
      %v386 = vld [vmem:[%s2 + $0x4] sm:$0xf]
      %vm387 = vcmask 31744
      %v388 = vsel %vm387, %v348, 0
      %v390 = vsel %vm387, %v350, 0
      %v392 = vsel %vm387, %v353, 0
      %v394 = vsel %vm387, %v355, 0
      %v396 = vsel %vm387, %v358, 0
      %v398 = vsel %vm387, %v360, 0
      %v400 = vsel %vm387, %v363, 0
      %v402 = vsel %vm387, %v365, 0
      %v404 = vsel %vm387, %v368, 0
      %v406 = vsel %vm387, %v370, 0
      %v408 = vsel %vm387, %v373, 0
      %v410 = vsel %vm387, %v375, 0
      %v412 = vsel %vm387, %v378, 0
      %v414 = vsel %vm387, %v380, 0
      %v416 = vsel %vm387, %v383, 0
      %v418 = vsel %vm387, %v385, 0
      %vm420 = vcmask 1043456
      %v422 = vsel %vm420, %v386, 0
      %424 = vmatprep.subr.mxu0 0.0
      %425 = vmatpush1.msra.mxu0 %v422
      %426 = vmatprep.subr.mxu0 0.0
      %427 = vmatpush1.msra.mxu0 0.0
      %428 = vmatprep.subr.mxu0 0.0
      %429 = vmatpush1.msra.mxu0 0.0
      %430 = vmatprep.subr.mxu0 0.0
      %431 = vmatpush1.msra.mxu0 0.0
      %432 = vmatprep.subr.mxu0 0.0
      %433 = vmatpush1.msra.mxu0 0.0
      %434 = vmatprep.subr.mxu0 0.0
      %435 = vmatpush1.msra.mxu0 0.0
      %436 = vmatprep.subr.mxu0 0.0
      %437 = vmatpush1.msra.mxu0 0.0
      %438 = vmatprep.subr.mxu0 0.0
      %439 = vmatpush1.msra.mxu0 0.0
      %440 = vmatprep.subr.mxu0 0.0
      %441 = vmatpush1.msra.mxu0 0.0
      %442 = vmatprep.subr.mxu0 0.0
      %443 = vmatpush1.msra.mxu0 0.0
      %444 = vmatprep.subr.mxu0 0.0
      %445 = vmatpush1.msra.mxu0 0.0
      %446 = vmatprep.subr.mxu0 0.0
      %447 = vmatpush1.msra.mxu0 0.0
      %448 = vmatprep.subr.mxu0 0.0
      %449 = vmatpush1.msra.mxu0 0.0
      %450 = vmatprep.subr.mxu0 0.0
      %451 = vmatpush1.msra.mxu0 0.0
      %452 = vmatprep.subr.mxu0 0.0
      %453 = vmatpush1.msra.mxu0 0.0
      %454 = vmatprep.subr.mxu0 0.0
      %455 = vmatpush1.msra.mxu0 0.0
      %456 = vmatprep.subr.mxu0 0.0
      %457 = vmatpush1.msra.mxu0 0.0
      %458 = vmatprep.subr.mxu0 0.0
      %459 = vmatpush1.msra.mxu0 0.0
      %460 = vmatprep.subr.mxu0 0.0
      %461 = vmatpush1.msra.mxu0 0.0
      %462 = vmatprep.subr.mxu0 0.0
      %463 = vmatpush1.msra.mxu0 0.0
      %464 = vmatprep.subr.mxu0 0.0
      %465 = vmatpush1.msra.mxu0 0.0
      %466 = vmatprep.subr.mxu0 0.0
      %467 = vmatpush1.msra.mxu0 0.0
      %468 = vmatprep.subr.mxu0 0.0
      %469 = vmatpush1.msra.mxu0 0.0
      %470 = vmatprep.subr.mxu0 0.0
      %471 = vmatpush1.msra.mxu0 0.0
      %472 = vmatprep.subr.mxu0 0.0
      %473 = vmatpush1.msra.mxu0 0.0
      %474 = vmatprep.subr.mxu0 0.0
      %475 = vmatpush1.msra.mxu0 0.0
      %476 = vmatprep.subr.mxu0 0.0
      %477 = vmatpush1.msra.mxu0 0.0
      %478 = vmatprep.subr.mxu0 0.0
      %479 = vmatpush1.msra.mxu0 0.0
      %480 = vmatprep.subr.mxu0 0.0
      %481 = vmatpush1.msra.mxu0 0.0
      %482 = vmatprep.subr.mxu0 0.0
      %483 = vmatpush1.msra.mxu0 0.0
      %484 = vmatprep.subr.mxu0 0.0
      %485 = vmatpush1.msra.mxu0 0.0
      %486 = vmatprep.subr.mxu0 0.0
      %487 = vmatpush1.msra.mxu0 0.0
      %488 = vmatprep.mubr.f32.mxu0 0.0
      %489 = vmatmul.mubr.f32.gmra.mrb[0].mxu0 %v388
      %v490 = vpop.f32.mrb[0].mxu0
      %v491 = vadd.f32 0.0, %v490
      %v492 = vpop.f32.mrb[0].mxu0
      %493 = vmatprep.mubr.f32.mxu0 0.0
      %494 = vmatmul.mubr.f32.gmra.mrb[0].mxu0 %v390
      %v495 = vpop.f32.mrb[0].mxu0
      %v496 = vadd.f32 0.0, %v495
      %v497 = vpop.f32.mrb[0].mxu0
      %498 = vmatprep.mubr.f32.mxu0 0.0
      %499 = vmatmul.mubr.f32.gmra.mrb[0].mxu0 %v392
      %v500 = vpop.f32.mrb[0].mxu0
      %v501 = vadd.f32 0.0, %v500
      %v502 = vpop.f32.mrb[0].mxu0
      %503 = vmatprep.mubr.f32.mxu0 0.0
      %504 = vmatmul.mubr.f32.gmra.mrb[0].mxu0 %v394
      %v505 = vpop.f32.mrb[0].mxu0
      %v506 = vadd.f32 0.0, %v505
      %v507 = vpop.f32.mrb[0].mxu0
      %508 = vmatprep.mubr.f32.mxu0 0.0
      %509 = vmatmul.mubr.f32.gmra.mrb[0].mxu0 %v396
      %v510 = vpop.f32.mrb[0].mxu0
      %v511 = vadd.f32 0.0, %v510
      %v512 = vpop.f32.mrb[0].mxu0
      %513 = vmatprep.mubr.f32.mxu0 0.0
      %514 = vmatmul.mubr.f32.gmra.mrb[0].mxu0 %v398
      %v515 = vpop.f32.mrb[0].mxu0
      %v516 = vadd.f32 0.0, %v515
      %v517 = vpop.f32.mrb[0].mxu0
      %518 = vmatprep.mubr.f32.mxu0 0.0
      %519 = vmatmul.mubr.f32.gmra.mrb[0].mxu0 %v400
      %v520 = vpop.f32.mrb[0].mxu0
      %v521 = vadd.f32 0.0, %v520
      %v522 = vpop.f32.mrb[0].mxu0
      %523 = vmatprep.mubr.f32.mxu0 0.0
      %524 = vmatmul.mubr.f32.gmra.mrb[0].mxu0 %v402
      %v525 = vpop.f32.mrb[0].mxu0
      %v526 = vadd.f32 0.0, %v525
      %v527 = vpop.f32.mrb[0].mxu0
      %528 = vmatprep.mubr.f32.mxu0 0.0
      %529 = vmatmul.mubr.f32.gmra.mrb[0].mxu0 %v404
      %v530 = vpop.f32.mrb[0].mxu0
      %v531 = vadd.f32 0.0, %v530
      %v532 = vpop.f32.mrb[0].mxu0
      %533 = vmatprep.mubr.f32.mxu0 0.0
      %534 = vmatmul.mubr.f32.gmra.mrb[0].mxu0 %v406
      %v535 = vpop.f32.mrb[0].mxu0
      %v536 = vadd.f32 0.0, %v535
      %v537 = vpop.f32.mrb[0].mxu0
      %538 = vmatprep.mubr.f32.mxu0 0.0
      %539 = vmatmul.mubr.f32.gmra.mrb[0].mxu0 %v408
      %v540 = vpop.f32.mrb[0].mxu0
      %v541 = vadd.f32 0.0, %v540
      %v542 = vpop.f32.mrb[0].mxu0
      %543 = vmatprep.mubr.f32.mxu0 0.0
      %544 = vmatmul.mubr.f32.gmra.mrb[0].mxu0 %v410
      %v545 = vpop.f32.mrb[0].mxu0
      %v546 = vadd.f32 0.0, %v545
      %v547 = vpop.f32.mrb[0].mxu0
      %548 = vmatprep.mubr.f32.mxu0 0.0
      %549 = vmatmul.mubr.f32.gmra.mrb[0].mxu0 %v412
      %v550 = vpop.f32.mrb[0].mxu0
      %v551 = vadd.f32 0.0, %v550
      %v552 = vpop.f32.mrb[0].mxu0
      %553 = vmatprep.mubr.f32.mxu0 0.0
      %554 = vmatmul.mubr.f32.gmra.mrb[0].mxu0 %v414
      %v555 = vpop.f32.mrb[0].mxu0
      %v556 = vadd.f32 0.0, %v555
      %v557 = vpop.f32.mrb[0].mxu0
      %558 = vmatprep.mubr.f32.mxu0 0.0
      %559 = vmatmul.mubr.f32.gmra.mrb[0].mxu0 %v416
      %v560 = vpop.f32.mrb[0].mxu0
      %v561 = vadd.f32 0.0, %v560
      %v562 = vpop.f32.mrb[0].mxu0
      %563 = vmatprep.mubr.f32.mxu0 0.0
      %564 = vmatmul.mubr.f32.gmra.mrb[0].mxu0 %v418
      %v565 = vpop.f32.mrb[0].mxu0
      %v566 = vadd.f32 0.0, %v565
      %v567 = vpop.f32.mrb[0].mxu0
      %568 = vdwg.mxu0
      %v569 = vsel %vm387, %v290, 0
      %v571 = vsel %vm387, %v291, 0
      %v573 = vsel %vm387, %v293, 0
      %v575 = vsel %vm387, %v294, 0
      %v577 = vsel %vm387, %v296, 0
      %v579 = vsel %vm387, %v297, 0
      %v581 = vsel %vm387, %v299, 0
      %v583 = vsel %vm387, %v300, 0
      %v585 = vsel %vm387, %v302, 0
      %v587 = vsel %vm387, %v303, 0
      %v589 = vsel %vm387, %v305, 0
      %v591 = vsel %vm387, %v306, 0
      %v593 = vsel %vm387, %v308, 0
      %v595 = vsel %vm387, %v309, 0
      %v597 = vsel %vm387, %v311, 0
      %v599 = vsel %vm387, %v312, 0
      %v602 = vsel %vm420, %v320, 0
      %604 = vmatprep.subr.mxu0 0.0
      %605 = vmatpush1.msra.mxu0 %v602
      %606 = vmatprep.subr.mxu0 0.0
      %607 = vmatpush1.msra.mxu0 0.0
      %608 = vmatprep.subr.mxu0 0.0
      %609 = vmatpush1.msra.mxu0 0.0
      %610 = vmatprep.subr.mxu0 0.0
      %611 = vmatpush1.msra.mxu0 0.0
      %612 = vmatprep.subr.mxu0 0.0
      %613 = vmatpush1.msra.mxu0 0.0
      %614 = vmatprep.subr.mxu0 0.0
      %615 = vmatpush1.msra.mxu0 0.0
      %616 = vmatprep.subr.mxu0 0.0
      %617 = vmatpush1.msra.mxu0 0.0
      %618 = vmatprep.subr.mxu0 0.0
      %619 = vmatpush1.msra.mxu0 0.0
      %620 = vmatprep.subr.mxu0 0.0
      %621 = vmatpush1.msra.mxu0 0.0
      %622 = vmatprep.subr.mxu0 0.0
      %623 = vmatpush1.msra.mxu0 0.0
      %624 = vmatprep.subr.mxu0 0.0
      %625 = vmatpush1.msra.mxu0 0.0
      %626 = vmatprep.subr.mxu0 0.0
      %627 = vmatpush1.msra.mxu0 0.0
      %628 = vmatprep.subr.mxu0 0.0
      %629 = vmatpush1.msra.mxu0 0.0
      %630 = vmatprep.subr.mxu0 0.0
      %631 = vmatpush1.msra.mxu0 0.0
      %632 = vmatprep.subr.mxu0 0.0
      %633 = vmatpush1.msra.mxu0 0.0
      %634 = vmatprep.subr.mxu0 0.0
      %635 = vmatpush1.msra.mxu0 0.0
      %636 = vmatprep.subr.mxu0 0.0
      %637 = vmatpush1.msra.mxu0 0.0
      %638 = vmatprep.subr.mxu0 0.0
      %639 = vmatpush1.msra.mxu0 0.0
      %640 = vmatprep.subr.mxu0 0.0
      %641 = vmatpush1.msra.mxu0 0.0
      %642 = vmatprep.subr.mxu0 0.0
      %643 = vmatpush1.msra.mxu0 0.0
      %644 = vmatprep.subr.mxu0 0.0
      %645 = vmatpush1.msra.mxu0 0.0
      %646 = vmatprep.subr.mxu0 0.0
      %647 = vmatpush1.msra.mxu0 0.0
      %648 = vmatprep.subr.mxu0 0.0
      %649 = vmatpush1.msra.mxu0 0.0
      %650 = vmatprep.subr.mxu0 0.0
      %651 = vmatpush1.msra.mxu0 0.0
      %652 = vmatprep.subr.mxu0 0.0
      %653 = vmatpush1.msra.mxu0 0.0
      %654 = vmatprep.subr.mxu0 0.0
      %655 = vmatpush1.msra.mxu0 0.0
      %656 = vmatprep.subr.mxu0 0.0
      %657 = vmatpush1.msra.mxu0 0.0
      %658 = vmatprep.subr.mxu0 0.0
      %659 = vmatpush1.msra.mxu0 0.0
      %660 = vmatprep.subr.mxu0 0.0
      %661 = vmatpush1.msra.mxu0 0.0
      %662 = vmatprep.subr.mxu0 0.0
      %663 = vmatpush1.msra.mxu0 0.0
      %664 = vmatprep.subr.mxu0 0.0
      %665 = vmatpush1.msra.mxu0 0.0
      %666 = vmatprep.subr.mxu0 0.0
      %667 = vmatpush1.msra.mxu0 0.0
      %668 = vmatprep.mubr.f32.mxu0 0.0
      %669 = vmatmul.mubr.f32.gmra.mrb[0].mxu0 %v569
      %v670 = vpop.f32.mrb[0].mxu0
      %v671 = vadd.f32 %v491, %v670
      %v672 = vpop.f32.mrb[0].mxu0
      %673 = vmatprep.mubr.f32.mxu0 0.0
      %674 = vmatmul.mubr.f32.gmra.mrb[0].mxu0 %v571
      %v675 = vpop.f32.mrb[0].mxu0
      %v676 = vadd.f32 %v496, %v675
      %v677 = vpop.f32.mrb[0].mxu0
      %678 = vmatprep.mubr.f32.mxu0 0.0
      %679 = vmatmul.mubr.f32.gmra.mrb[0].mxu0 %v573
      %v680 = vpop.f32.mrb[0].mxu0
      %v681 = vadd.f32 %v501, %v680
      %v682 = vpop.f32.mrb[0].mxu0
      %683 = vmatprep.mubr.f32.mxu0 0.0
      %684 = vmatmul.mubr.f32.gmra.mrb[0].mxu0 %v575
      %v685 = vpop.f32.mrb[0].mxu0
      %v686 = vadd.f32 %v506, %v685
      %v687 = vpop.f32.mrb[0].mxu0
      %688 = vmatprep.mubr.f32.mxu0 0.0
      %689 = vmatmul.mubr.f32.gmra.mrb[0].mxu0 %v577
      %v690 = vpop.f32.mrb[0].mxu0
      %v691 = vadd.f32 %v511, %v690
      %v692 = vpop.f32.mrb[0].mxu0
      %693 = vmatprep.mubr.f32.mxu0 0.0
      %694 = vmatmul.mubr.f32.gmra.mrb[0].mxu0 %v579
      %v695 = vpop.f32.mrb[0].mxu0
      %v696 = vadd.f32 %v516, %v695
      %v697 = vpop.f32.mrb[0].mxu0
      %698 = vmatprep.mubr.f32.mxu0 0.0
      %699 = vmatmul.mubr.f32.gmra.mrb[0].mxu0 %v581
      %v700 = vpop.f32.mrb[0].mxu0
      %v701 = vadd.f32 %v521, %v700
      %v702 = vpop.f32.mrb[0].mxu0
      %703 = vmatprep.mubr.f32.mxu0 0.0
      %704 = vmatmul.mubr.f32.gmra.mrb[0].mxu0 %v583
      %v705 = vpop.f32.mrb[0].mxu0
      %v706 = vadd.f32 %v526, %v705
      %v707 = vpop.f32.mrb[0].mxu0
      %708 = vmatprep.mubr.f32.mxu0 0.0
      %709 = vmatmul.mubr.f32.gmra.mrb[0].mxu0 %v585
      %v710 = vpop.f32.mrb[0].mxu0
      %v711 = vadd.f32 %v531, %v710
      %v712 = vpop.f32.mrb[0].mxu0
      %713 = vmatprep.mubr.f32.mxu0 0.0
      %714 = vmatmul.mubr.f32.gmra.mrb[0].mxu0 %v587
      %v715 = vpop.f32.mrb[0].mxu0
      %v716 = vadd.f32 %v536, %v715
      %v717 = vpop.f32.mrb[0].mxu0
      %718 = vmatprep.mubr.f32.mxu0 0.0
      %719 = vmatmul.mubr.f32.gmra.mrb[0].mxu0 %v589
      %v720 = vpop.f32.mrb[0].mxu0
      %v721 = vadd.f32 %v541, %v720
      %v722 = vpop.f32.mrb[0].mxu0
      %723 = vmatprep.mubr.f32.mxu0 0.0
      %724 = vmatmul.mubr.f32.gmra.mrb[0].mxu0 %v591
      %v725 = vpop.f32.mrb[0].mxu0
      %v726 = vadd.f32 %v546, %v725
      %v727 = vpop.f32.mrb[0].mxu0
      %728 = vmatprep.mubr.f32.mxu0 0.0
      %729 = vmatmul.mubr.f32.gmra.mrb[0].mxu0 %v593
      %v730 = vpop.f32.mrb[0].mxu0
      %v731 = vadd.f32 %v551, %v730
      %v732 = vpop.f32.mrb[0].mxu0
      %733 = vmatprep.mubr.f32.mxu0 0.0
      %734 = vmatmul.mubr.f32.gmra.mrb[0].mxu0 %v595
      %v735 = vpop.f32.mrb[0].mxu0
      %v736 = vadd.f32 %v556, %v735
      %v737 = vpop.f32.mrb[0].mxu0
      %738 = vmatprep.mubr.f32.mxu0 0.0
      %739 = vmatmul.mubr.f32.gmra.mrb[0].mxu0 %v597
      %v740 = vpop.f32.mrb[0].mxu0
      %v741 = vadd.f32 %v561, %v740
      %v742 = vpop.f32.mrb[0].mxu0
      %743 = vmatprep.mubr.f32.mxu0 0.0
      %744 = vmatmul.mubr.f32.gmra.mrb[0].mxu0 %v599
      %v745 = vpop.f32.mrb[0].mxu0
      %v746 = vadd.f32 %v566, %v745
      %v747 = vpop.f32.mrb[0].mxu0
      %748 = vdwg.mxu0
      %vm749 = vcmask 1045504
      %v750 = vrot.slane %v290, 2
      %v751 = vrot.slane %v291, 2
      %v752 = vsel %vm749, %v750, %v751
      %v753 = vrot.slane %v292, 2
      %v754 = vsel %vm749, %v751, %v753
      %v755 = vrot.slane %v293, 2
      %v756 = vrot.slane %v294, 2
      %v757 = vsel %vm749, %v755, %v756
      %v758 = vrot.slane %v295, 2
      %v759 = vsel %vm749, %v756, %v758
      %v760 = vrot.slane %v296, 2
      %v761 = vrot.slane %v297, 2
      %v762 = vsel %vm749, %v760, %v761
      %v763 = vrot.slane %v298, 2
      %v764 = vsel %vm749, %v761, %v763
      %v765 = vrot.slane %v299, 2
      %v766 = vrot.slane %v300, 2
      %v767 = vsel %vm749, %v765, %v766
      %v768 = vrot.slane %v301, 2
      %v769 = vsel %vm749, %v766, %v768
      %v770 = vrot.slane %v302, 2
      %v771 = vrot.slane %v303, 2
      %v772 = vsel %vm749, %v770, %v771
      %v773 = vrot.slane %v304, 2
      %v774 = vsel %vm749, %v771, %v773
      %v775 = vrot.slane %v305, 2
      %v776 = vrot.slane %v306, 2
      %v777 = vsel %vm749, %v775, %v776
      %v778 = vrot.slane %v307, 2
      %v779 = vsel %vm749, %v776, %v778
      %v780 = vrot.slane %v308, 2
      %v781 = vrot.slane %v309, 2
      %v782 = vsel %vm749, %v780, %v781
      %v783 = vrot.slane %v310, 2
      %v784 = vsel %vm749, %v781, %v783
      %v785 = vrot.slane %v311, 2
      %v786 = vrot.slane %v312, 2
      %v787 = vsel %vm749, %v785, %v786
      %v788 = vrot.slane %v313, 2
      %v789 = vsel %vm749, %v786, %v788
      %v790 = vld [vmem:[%s2 + $0x8] sm:$0xf]
      %v791 = vsel %vm387, %v752, 0
      %v793 = vsel %vm387, %v754, 0
      %v795 = vsel %vm387, %v757, 0
      %v797 = vsel %vm387, %v759, 0
      %v799 = vsel %vm387, %v762, 0
      %v801 = vsel %vm387, %v764, 0
      %v803 = vsel %vm387, %v767, 0
      %v805 = vsel %vm387, %v769, 0
      %v807 = vsel %vm387, %v772, 0
      %v809 = vsel %vm387, %v774, 0
      %v811 = vsel %vm387, %v777, 0
      %v813 = vsel %vm387, %v779, 0
      %v815 = vsel %vm387, %v782, 0
      %v817 = vsel %vm387, %v784, 0
      %v819 = vsel %vm387, %v787, 0
      %v821 = vsel %vm387, %v789, 0
      %v824 = vsel %vm420, %v790, 0
      %826 = vmatprep.subr.mxu0 0.0
      %827 = vmatpush1.msra.mxu0 %v824
      %828 = vmatprep.subr.mxu0 0.0
      %829 = vmatpush1.msra.mxu0 0.0
      %830 = vmatprep.subr.mxu0 0.0
      %831 = vmatpush1.msra.mxu0 0.0
      %832 = vmatprep.subr.mxu0 0.0
      %833 = vmatpush1.msra.mxu0 0.0
      %834 = vmatprep.subr.mxu0 0.0
      %835 = vmatpush1.msra.mxu0 0.0
      %836 = vmatprep.subr.mxu0 0.0
      %837 = vmatpush1.msra.mxu0 0.0
      %838 = vmatprep.subr.mxu0 0.0
      %839 = vmatpush1.msra.mxu0 0.0
      %840 = vmatprep.subr.mxu0 0.0
      %841 = vmatpush1.msra.mxu0 0.0
      %842 = vmatprep.subr.mxu0 0.0
      %843 = vmatpush1.msra.mxu0 0.0
      %844 = vmatprep.subr.mxu0 0.0
      %845 = vmatpush1.msra.mxu0 0.0
      %846 = vmatprep.subr.mxu0 0.0
      %847 = vmatpush1.msra.mxu0 0.0
      %848 = vmatprep.subr.mxu0 0.0
      %849 = vmatpush1.msra.mxu0 0.0
      %850 = vmatprep.subr.mxu0 0.0
      %851 = vmatpush1.msra.mxu0 0.0
      %852 = vmatprep.subr.mxu0 0.0
      %853 = vmatpush1.msra.mxu0 0.0
      %854 = vmatprep.subr.mxu0 0.0
      %855 = vmatpush1.msra.mxu0 0.0
      %856 = vmatprep.subr.mxu0 0.0
      %857 = vmatpush1.msra.mxu0 0.0
      %858 = vmatprep.subr.mxu0 0.0
      %859 = vmatpush1.msra.mxu0 0.0
      %860 = vmatprep.subr.mxu0 0.0
      %861 = vmatpush1.msra.mxu0 0.0
      %862 = vmatprep.subr.mxu0 0.0
      %863 = vmatpush1.msra.mxu0 0.0
      %864 = vmatprep.subr.mxu0 0.0
      %865 = vmatpush1.msra.mxu0 0.0
      %866 = vmatprep.subr.mxu0 0.0
      %867 = vmatpush1.msra.mxu0 0.0
      %868 = vmatprep.subr.mxu0 0.0
      %869 = vmatpush1.msra.mxu0 0.0
      %870 = vmatprep.subr.mxu0 0.0
      %871 = vmatpush1.msra.mxu0 0.0
      %872 = vmatprep.subr.mxu0 0.0
      %873 = vmatpush1.msra.mxu0 0.0
      %874 = vmatprep.subr.mxu0 0.0
      %875 = vmatpush1.msra.mxu0 0.0
      %876 = vmatprep.subr.mxu0 0.0
      %877 = vmatpush1.msra.mxu0 0.0
      %878 = vmatprep.subr.mxu0 0.0
      %879 = vmatpush1.msra.mxu0 0.0
      %880 = vmatprep.subr.mxu0 0.0
      %881 = vmatpush1.msra.mxu0 0.0
      %882 = vmatprep.subr.mxu0 0.0
      %883 = vmatpush1.msra.mxu0 0.0
      %884 = vmatprep.subr.mxu0 0.0
      %885 = vmatpush1.msra.mxu0 0.0
      %886 = vmatprep.subr.mxu0 0.0
      %887 = vmatpush1.msra.mxu0 0.0
      %888 = vmatprep.subr.mxu0 0.0
      %889 = vmatpush1.msra.mxu0 0.0
      %890 = vmatprep.mubr.f32.mxu0 0.0
      %891 = vmatmul.mubr.f32.gmra.mrb[0].mxu0 %v791
      %v892 = vpop.f32.mrb[0].mxu0
      %v893 = vadd.f32 0.0, %v892
      %v894 = vpop.f32.mrb[0].mxu0
      %895 = vmatprep.mubr.f32.mxu0 0.0
      %896 = vmatmul.mubr.f32.gmra.mrb[0].mxu0 %v793
      %v897 = vpop.f32.mrb[0].mxu0
      %v898 = vadd.f32 0.0, %v897
      %v899 = vpop.f32.mrb[0].mxu0
      %900 = vmatprep.mubr.f32.mxu0 0.0
      %901 = vmatmul.mubr.f32.gmra.mrb[0].mxu0 %v795
      %v902 = vpop.f32.mrb[0].mxu0
      %v903 = vadd.f32 0.0, %v902
      %v904 = vpop.f32.mrb[0].mxu0
      %905 = vmatprep.mubr.f32.mxu0 0.0
      %906 = vmatmul.mubr.f32.gmra.mrb[0].mxu0 %v797
      %v907 = vpop.f32.mrb[0].mxu0
      %v908 = vadd.f32 0.0, %v907
      %v909 = vpop.f32.mrb[0].mxu0
      %910 = vmatprep.mubr.f32.mxu0 0.0
      %911 = vmatmul.mubr.f32.gmra.mrb[0].mxu0 %v799
      %v912 = vpop.f32.mrb[0].mxu0
      %v913 = vadd.f32 0.0, %v912
      %v914 = vpop.f32.mrb[0].mxu0
      %915 = vmatprep.mubr.f32.mxu0 0.0
      %916 = vmatmul.mubr.f32.gmra.mrb[0].mxu0 %v801
      %v917 = vpop.f32.mrb[0].mxu0
      %v918 = vadd.f32 0.0, %v917
      %v919 = vpop.f32.mrb[0].mxu0
      %920 = vmatprep.mubr.f32.mxu0 0.0
      %921 = vmatmul.mubr.f32.gmra.mrb[0].mxu0 %v803
      %v922 = vpop.f32.mrb[0].mxu0
      %v923 = vadd.f32 0.0, %v922
      %v924 = vpop.f32.mrb[0].mxu0
      %925 = vmatprep.mubr.f32.mxu0 0.0
      %926 = vmatmul.mubr.f32.gmra.mrb[0].mxu0 %v805
      %v927 = vpop.f32.mrb[0].mxu0
      %v928 = vadd.f32 0.0, %v927
      %v929 = vpop.f32.mrb[0].mxu0
      %930 = vmatprep.mubr.f32.mxu0 0.0
      %931 = vmatmul.mubr.f32.gmra.mrb[0].mxu0 %v807
      %v932 = vpop.f32.mrb[0].mxu0
      %v933 = vadd.f32 0.0, %v932
      %v934 = vpop.f32.mrb[0].mxu0
      %935 = vmatprep.mubr.f32.mxu0 0.0
      %936 = vmatmul.mubr.f32.gmra.mrb[0].mxu0 %v809
      %v937 = vpop.f32.mrb[0].mxu0
      %v938 = vadd.f32 0.0, %v937
      %v939 = vpop.f32.mrb[0].mxu0
      %940 = vmatprep.mubr.f32.mxu0 0.0
      %941 = vmatmul.mubr.f32.gmra.mrb[0].mxu0 %v811
      %v942 = vpop.f32.mrb[0].mxu0
      %v943 = vadd.f32 0.0, %v942
      %v944 = vpop.f32.mrb[0].mxu0
      %945 = vmatprep.mubr.f32.mxu0 0.0
      %946 = vmatmul.mubr.f32.gmra.mrb[0].mxu0 %v813
      %v947 = vpop.f32.mrb[0].mxu0
      %v948 = vadd.f32 0.0, %v947
      %v949 = vpop.f32.mrb[0].mxu0
      %950 = vmatprep.mubr.f32.mxu0 0.0
      %951 = vmatmul.mubr.f32.gmra.mrb[0].mxu0 %v815
      %v952 = vpop.f32.mrb[0].mxu0
      %v953 = vadd.f32 0.0, %v952
      %v954 = vpop.f32.mrb[0].mxu0
      %955 = vmatprep.mubr.f32.mxu0 0.0
      %956 = vmatmul.mubr.f32.gmra.mrb[0].mxu0 %v817
      %v957 = vpop.f32.mrb[0].mxu0
      %v958 = vadd.f32 0.0, %v957
      %v959 = vpop.f32.mrb[0].mxu0
      %960 = vmatprep.mubr.f32.mxu0 0.0
      %961 = vmatmul.mubr.f32.gmra.mrb[0].mxu0 %v819
      %v962 = vpop.f32.mrb[0].mxu0
      %v963 = vadd.f32 0.0, %v962
      %v964 = vpop.f32.mrb[0].mxu0
      %965 = vmatprep.mubr.f32.mxu0 0.0
      %966 = vmatmul.mubr.f32.gmra.mrb[0].mxu0 %v821
      %v967 = vpop.f32.mrb[0].mxu0
      %v968 = vadd.f32 0.0, %v967
      %v969 = vpop.f32.mrb[0].mxu0
      %970 = vdwg.mxu0
      %v971 = vadd.f32 %v671, %v893
      %v972 = vadd.f32 %v676, %v898
      %v973 = vadd.f32 %v681, %v903
      %v974 = vadd.f32 %v686, %v908
      %v975 = vadd.f32 %v691, %v913
      %v976 = vadd.f32 %v696, %v918
      %v977 = vadd.f32 %v701, %v923
      %v978 = vadd.f32 %v706, %v928
      %v979 = vadd.f32 %v711, %v933
      %v980 = vadd.f32 %v716, %v938
      %v981 = vadd.f32 %v721, %v943
      %v982 = vadd.f32 %v726, %v948
      %v983 = vadd.f32 %v731, %v953
      %v984 = vadd.f32 %v736, %v958
      %v985 = vadd.f32 %v741, %v963
      %v986 = vadd.f32 %v746, %v968
      %v987 = vld [vmem:[%s2 + $0xc] sm:$0xf]
      %v989 = vsel %vm387, %v314, 0
      %v992 = vsel %vm387, %v315, 0
      %v995 = vsel %vm420, %v987, 0
      %997 = vmatprep.subr.mxu0 0.0
      %998 = vmatpush1.msra.mxu0 %v995
      %999 = vmatprep.subr.mxu0 0.0
      %1000 = vmatpush1.msra.mxu0 0.0
      %1001 = vmatprep.subr.mxu0 0.0
      %1002 = vmatpush1.msra.mxu0 0.0
      %1003 = vmatprep.subr.mxu0 0.0
      %1004 = vmatpush1.msra.mxu0 0.0
      %1005 = vmatprep.subr.mxu0 0.0
      %1006 = vmatpush1.msra.mxu0 0.0
      %1007 = vmatprep.subr.mxu0 0.0
      %1008 = vmatpush1.msra.mxu0 0.0
      %1009 = vmatprep.subr.mxu0 0.0
      %1010 = vmatpush1.msra.mxu0 0.0
      %1011 = vmatprep.subr.mxu0 0.0
      %1012 = vmatpush1.msra.mxu0 0.0
      %1013 = vmatprep.subr.mxu0 0.0
      %1014 = vmatpush1.msra.mxu0 0.0
      %1015 = vmatprep.subr.mxu0 0.0
      %1016 = vmatpush1.msra.mxu0 0.0
      %1017 = vmatprep.subr.mxu0 0.0
      %1018 = vmatpush1.msra.mxu0 0.0
      %1019 = vmatprep.subr.mxu0 0.0
      %1020 = vmatpush1.msra.mxu0 0.0
      %1021 = vmatprep.subr.mxu0 0.0
      %1022 = vmatpush1.msra.mxu0 0.0
      %1023 = vmatprep.subr.mxu0 0.0
      %1024 = vmatpush1.msra.mxu0 0.0
      %1025 = vmatprep.subr.mxu0 0.0
      %1026 = vmatpush1.msra.mxu0 0.0
      %1027 = vmatprep.subr.mxu0 0.0
      %1028 = vmatpush1.msra.mxu0 0.0
      %1029 = vmatprep.subr.mxu0 0.0
      %1030 = vmatpush1.msra.mxu0 0.0
      %1031 = vmatprep.subr.mxu0 0.0
      %1032 = vmatpush1.msra.mxu0 0.0
      %1033 = vmatprep.subr.mxu0 0.0
      %1034 = vmatpush1.msra.mxu0 0.0
      %1035 = vmatprep.subr.mxu0 0.0
      %1036 = vmatpush1.msra.mxu0 0.0
      %1037 = vmatprep.subr.mxu0 0.0
      %1038 = vmatpush1.msra.mxu0 0.0
      %1039 = vmatprep.subr.mxu0 0.0
      %1040 = vmatpush1.msra.mxu0 0.0
      %1041 = vmatprep.subr.mxu0 0.0
      %1042 = vmatpush1.msra.mxu0 0.0
      %1043 = vmatprep.subr.mxu0 0.0
      %1044 = vmatpush1.msra.mxu0 0.0
      %1045 = vmatprep.subr.mxu0 0.0
      %1046 = vmatpush1.msra.mxu0 0.0
      %1047 = vmatprep.subr.mxu0 0.0
      %1048 = vmatpush1.msra.mxu0 0.0
      %1049 = vmatprep.subr.mxu0 0.0
      %1050 = vmatpush1.msra.mxu0 0.0
      %1051 = vmatprep.subr.mxu0 0.0
      %1052 = vmatpush1.msra.mxu0 0.0
      %1053 = vmatprep.subr.mxu0 0.0
      %1054 = vmatpush1.msra.mxu0 0.0
      %1055 = vmatprep.subr.mxu0 0.0
      %1056 = vmatpush1.msra.mxu0 0.0
      %1057 = vmatprep.subr.mxu0 0.0
      %1058 = vmatpush1.msra.mxu0 0.0
      %1059 = vmatprep.subr.mxu0 0.0
      %1060 = vmatpush1.msra.mxu0 0.0
      %1061 = vmatprep.mubr.f32.mxu0 0.0
      %1062 = vmatmul.mubr.f32.gmra.mrb[0].mxu0 %v573
      %v1063 = vpop.f32.mrb[0].mxu0
      %v1064 = vadd.f32 0.0, %v1063
      %v1065 = vpop.f32.mrb[0].mxu0
      %1066 = vmatprep.mubr.f32.mxu0 0.0
      %1067 = vmatmul.mubr.f32.gmra.mrb[0].mxu0 %v575
      %v1068 = vpop.f32.mrb[0].mxu0
      %v1069 = vadd.f32 0.0, %v1068
      %v1070 = vpop.f32.mrb[0].mxu0
      %1071 = vmatprep.mubr.f32.mxu0 0.0
      %1072 = vmatmul.mubr.f32.gmra.mrb[0].mxu0 %v577
      %v1073 = vpop.f32.mrb[0].mxu0
      %v1074 = vadd.f32 0.0, %v1073
      %v1075 = vpop.f32.mrb[0].mxu0
      %1076 = vmatprep.mubr.f32.mxu0 0.0
      %1077 = vmatmul.mubr.f32.gmra.mrb[0].mxu0 %v579
      %v1078 = vpop.f32.mrb[0].mxu0
      %v1079 = vadd.f32 0.0, %v1078
      %v1080 = vpop.f32.mrb[0].mxu0
      %1081 = vmatprep.mubr.f32.mxu0 0.0
      %1082 = vmatmul.mubr.f32.gmra.mrb[0].mxu0 %v581
      %v1083 = vpop.f32.mrb[0].mxu0
      %v1084 = vadd.f32 0.0, %v1083
      %v1085 = vpop.f32.mrb[0].mxu0
      %1086 = vmatprep.mubr.f32.mxu0 0.0
      %1087 = vmatmul.mubr.f32.gmra.mrb[0].mxu0 %v583
      %v1088 = vpop.f32.mrb[0].mxu0
      %v1089 = vadd.f32 0.0, %v1088
      %v1090 = vpop.f32.mrb[0].mxu0
      %1091 = vmatprep.mubr.f32.mxu0 0.0
      %1092 = vmatmul.mubr.f32.gmra.mrb[0].mxu0 %v585
      %v1093 = vpop.f32.mrb[0].mxu0
      %v1094 = vadd.f32 0.0, %v1093
      %v1095 = vpop.f32.mrb[0].mxu0
      %1096 = vmatprep.mubr.f32.mxu0 0.0
      %1097 = vmatmul.mubr.f32.gmra.mrb[0].mxu0 %v587
      %v1098 = vpop.f32.mrb[0].mxu0
      %v1099 = vadd.f32 0.0, %v1098
      %v1100 = vpop.f32.mrb[0].mxu0
      %1101 = vmatprep.mubr.f32.mxu0 0.0
      %1102 = vmatmul.mubr.f32.gmra.mrb[0].mxu0 %v589
      %v1103 = vpop.f32.mrb[0].mxu0
      %v1104 = vadd.f32 0.0, %v1103
      %v1105 = vpop.f32.mrb[0].mxu0
      %1106 = vmatprep.mubr.f32.mxu0 0.0
      %1107 = vmatmul.mubr.f32.gmra.mrb[0].mxu0 %v591
      %v1108 = vpop.f32.mrb[0].mxu0
      %v1109 = vadd.f32 0.0, %v1108
      %v1110 = vpop.f32.mrb[0].mxu0
      %1111 = vmatprep.mubr.f32.mxu0 0.0
      %1112 = vmatmul.mubr.f32.gmra.mrb[0].mxu0 %v593
      %v1113 = vpop.f32.mrb[0].mxu0
      %v1114 = vadd.f32 0.0, %v1113
      %v1115 = vpop.f32.mrb[0].mxu0
      %1116 = vmatprep.mubr.f32.mxu0 0.0
      %1117 = vmatmul.mubr.f32.gmra.mrb[0].mxu0 %v595
      %v1118 = vpop.f32.mrb[0].mxu0
      %v1119 = vadd.f32 0.0, %v1118
      %v1120 = vpop.f32.mrb[0].mxu0
      %1121 = vmatprep.mubr.f32.mxu0 0.0
      %1122 = vmatmul.mubr.f32.gmra.mrb[0].mxu0 %v597
      %v1123 = vpop.f32.mrb[0].mxu0
      %v1124 = vadd.f32 0.0, %v1123
      %v1125 = vpop.f32.mrb[0].mxu0
      %1126 = vmatprep.mubr.f32.mxu0 0.0
      %1127 = vmatmul.mubr.f32.gmra.mrb[0].mxu0 %v599
      %v1128 = vpop.f32.mrb[0].mxu0
      %v1129 = vadd.f32 0.0, %v1128
      %v1130 = vpop.f32.mrb[0].mxu0
      %1131 = vmatprep.mubr.f32.mxu0 0.0
      %1132 = vmatmul.mubr.f32.gmra.mrb[0].mxu0 %v989
      %v1133 = vpop.f32.mrb[0].mxu0
      %v1134 = vadd.f32 0.0, %v1133
      %v1135 = vpop.f32.mrb[0].mxu0
      %1136 = vmatprep.mubr.f32.mxu0 0.0
      %1137 = vmatmul.mubr.f32.gmra.mrb[0].mxu0 %v992
      %v1138 = vpop.f32.mrb[0].mxu0
      %v1139 = vadd.f32 0.0, %v1138
      %v1140 = vpop.f32.mrb[0].mxu0
      %1141 = vdwg.mxu0
      %v1142 = vadd.f32 %v971, %v1064
      %v1143 = vadd.f32 %v972, %v1069
      %v1144 = vadd.f32 %v973, %v1074
      %v1145 = vadd.f32 %v974, %v1079
      %v1146 = vadd.f32 %v975, %v1084
      %v1147 = vadd.f32 %v976, %v1089
      %v1148 = vadd.f32 %v977, %v1094
      %v1149 = vadd.f32 %v978, %v1099
      %v1150 = vadd.f32 %v979, %v1104
      %v1151 = vadd.f32 %v980, %v1109
      %v1152 = vadd.f32 %v981, %v1114
      %v1153 = vadd.f32 %v982, %v1119
      %v1154 = vadd.f32 %v983, %v1124
      %v1155 = vadd.f32 %v984, %v1129
      %v1156 = vadd.f32 %v985, %v1134
      %v1157 = vadd.f32 %v986, %v1139
      %v1159 = vrot.slane %v314, 1
      %v1160 = vrot.slane %v315, 1
      %v1161 = vsel %vm345, %v1159, %v1160
      %v1162 = vrot.slane %v316, 1
      %v1163 = vsel %vm345, %v1160, %v1162
      %v1164 = vld [vmem:[%s2 + $0x10] sm:$0xf]
      %v1165 = vsel %vm387, %v1161, 0
      %v1167 = vsel %vm387, %v1163, 0
      %v1170 = vsel %vm420, %v1164, 0
      %1172 = vmatprep.subr.mxu0 0.0
      %1173 = vmatpush1.msra.mxu0 %v1170
      %1174 = vmatprep.subr.mxu0 0.0
      %1175 = vmatpush1.msra.mxu0 0.0
      %1176 = vmatprep.subr.mxu0 0.0
      %1177 = vmatpush1.msra.mxu0 0.0
      %1178 = vmatprep.subr.mxu0 0.0
      %1179 = vmatpush1.msra.mxu0 0.0
      %1180 = vmatprep.subr.mxu0 0.0
      %1181 = vmatpush1.msra.mxu0 0.0
      %1182 = vmatprep.subr.mxu0 0.0
      %1183 = vmatpush1.msra.mxu0 0.0
      %1184 = vmatprep.subr.mxu0 0.0
      %1185 = vmatpush1.msra.mxu0 0.0
      %1186 = vmatprep.subr.mxu0 0.0
      %1187 = vmatpush1.msra.mxu0 0.0
      %1188 = vmatprep.subr.mxu0 0.0
      %1189 = vmatpush1.msra.mxu0 0.0
      %1190 = vmatprep.subr.mxu0 0.0
      %1191 = vmatpush1.msra.mxu0 0.0
      %1192 = vmatprep.subr.mxu0 0.0
      %1193 = vmatpush1.msra.mxu0 0.0
      %1194 = vmatprep.subr.mxu0 0.0
      %1195 = vmatpush1.msra.mxu0 0.0
      %1196 = vmatprep.subr.mxu0 0.0
      %1197 = vmatpush1.msra.mxu0 0.0
      %1198 = vmatprep.subr.mxu0 0.0
      %1199 = vmatpush1.msra.mxu0 0.0
      %1200 = vmatprep.subr.mxu0 0.0
      %1201 = vmatpush1.msra.mxu0 0.0
      %1202 = vmatprep.subr.mxu0 0.0
      %1203 = vmatpush1.msra.mxu0 0.0
      %1204 = vmatprep.subr.mxu0 0.0
      %1205 = vmatpush1.msra.mxu0 0.0
      %1206 = vmatprep.subr.mxu0 0.0
      %1207 = vmatpush1.msra.mxu0 0.0
      %1208 = vmatprep.subr.mxu0 0.0
      %1209 = vmatpush1.msra.mxu0 0.0
      %1210 = vmatprep.subr.mxu0 0.0
      %1211 = vmatpush1.msra.mxu0 0.0
      %1212 = vmatprep.subr.mxu0 0.0
      %1213 = vmatpush1.msra.mxu0 0.0
      %1214 = vmatprep.subr.mxu0 0.0
      %1215 = vmatpush1.msra.mxu0 0.0
      %1216 = vmatprep.subr.mxu0 0.0
      %1217 = vmatpush1.msra.mxu0 0.0
      %1218 = vmatprep.subr.mxu0 0.0
      %1219 = vmatpush1.msra.mxu0 0.0
      %1220 = vmatprep.subr.mxu0 0.0
      %1221 = vmatpush1.msra.mxu0 0.0
      %1222 = vmatprep.subr.mxu0 0.0
      %1223 = vmatpush1.msra.mxu0 0.0
      %1224 = vmatprep.subr.mxu0 0.0
      %1225 = vmatpush1.msra.mxu0 0.0
      %1226 = vmatprep.subr.mxu0 0.0
      %1227 = vmatpush1.msra.mxu0 0.0
      %1228 = vmatprep.subr.mxu0 0.0
      %1229 = vmatpush1.msra.mxu0 0.0
      %1230 = vmatprep.subr.mxu0 0.0
      %1231 = vmatpush1.msra.mxu0 0.0
      %1232 = vmatprep.subr.mxu0 0.0
      %1233 = vmatpush1.msra.mxu0 0.0
      %1234 = vmatprep.subr.mxu0 0.0
      %1235 = vmatpush1.msra.mxu0 0.0
      %1236 = vmatprep.mubr.f32.mxu0 0.0
      %1237 = vmatmul.mubr.f32.gmra.mrb[0].mxu0 %v392
      %v1238 = vpop.f32.mrb[0].mxu0
      %v1239 = vadd.f32 0.0, %v1238
      %v1240 = vpop.f32.mrb[0].mxu0
      %1241 = vmatprep.mubr.f32.mxu0 0.0
      %1242 = vmatmul.mubr.f32.gmra.mrb[0].mxu0 %v394
      %v1243 = vpop.f32.mrb[0].mxu0
      %v1244 = vadd.f32 0.0, %v1243
      %v1245 = vpop.f32.mrb[0].mxu0
      %1246 = vmatprep.mubr.f32.mxu0 0.0
      %1247 = vmatmul.mubr.f32.gmra.mrb[0].mxu0 %v396
      %v1248 = vpop.f32.mrb[0].mxu0
      %v1249 = vadd.f32 0.0, %v1248
      %v1250 = vpop.f32.mrb[0].mxu0
      %1251 = vmatprep.mubr.f32.mxu0 0.0
      %1252 = vmatmul.mubr.f32.gmra.mrb[0].mxu0 %v398
      %v1253 = vpop.f32.mrb[0].mxu0
      %v1254 = vadd.f32 0.0, %v1253
      %v1255 = vpop.f32.mrb[0].mxu0
      %1256 = vmatprep.mubr.f32.mxu0 0.0
      %1257 = vmatmul.mubr.f32.gmra.mrb[0].mxu0 %v400
      %v1258 = vpop.f32.mrb[0].mxu0
      %v1259 = vadd.f32 0.0, %v1258
      %v1260 = vpop.f32.mrb[0].mxu0
      %1261 = vmatprep.mubr.f32.mxu0 0.0
      %1262 = vmatmul.mubr.f32.gmra.mrb[0].mxu0 %v402
      %v1263 = vpop.f32.mrb[0].mxu0
      %v1264 = vadd.f32 0.0, %v1263
      %v1265 = vpop.f32.mrb[0].mxu0
      %1266 = vmatprep.mubr.f32.mxu0 0.0
      %1267 = vmatmul.mubr.f32.gmra.mrb[0].mxu0 %v404
      %v1268 = vpop.f32.mrb[0].mxu0
      %v1269 = vadd.f32 0.0, %v1268
      %v1270 = vpop.f32.mrb[0].mxu0
      %1271 = vmatprep.mubr.f32.mxu0 0.0
      %1272 = vmatmul.mubr.f32.gmra.mrb[0].mxu0 %v406
      %v1273 = vpop.f32.mrb[0].mxu0
      %v1274 = vadd.f32 0.0, %v1273
      %v1275 = vpop.f32.mrb[0].mxu0
      %1276 = vmatprep.mubr.f32.mxu0 0.0
      %1277 = vmatmul.mubr.f32.gmra.mrb[0].mxu0 %v408
      %v1278 = vpop.f32.mrb[0].mxu0
      %v1279 = vadd.f32 0.0, %v1278
      %v1280 = vpop.f32.mrb[0].mxu0
      %1281 = vmatprep.mubr.f32.mxu0 0.0
      %1282 = vmatmul.mubr.f32.gmra.mrb[0].mxu0 %v410
      %v1283 = vpop.f32.mrb[0].mxu0
      %v1284 = vadd.f32 0.0, %v1283
      %v1285 = vpop.f32.mrb[0].mxu0
      %1286 = vmatprep.mubr.f32.mxu0 0.0
      %1287 = vmatmul.mubr.f32.gmra.mrb[0].mxu0 %v412
      %v1288 = vpop.f32.mrb[0].mxu0
      %v1289 = vadd.f32 0.0, %v1288
      %v1290 = vpop.f32.mrb[0].mxu0
      %1291 = vmatprep.mubr.f32.mxu0 0.0
      %1292 = vmatmul.mubr.f32.gmra.mrb[0].mxu0 %v414
      %v1293 = vpop.f32.mrb[0].mxu0
      %v1294 = vadd.f32 0.0, %v1293
      %v1295 = vpop.f32.mrb[0].mxu0
      %1296 = vmatprep.mubr.f32.mxu0 0.0
      %1297 = vmatmul.mubr.f32.gmra.mrb[0].mxu0 %v416
      %v1298 = vpop.f32.mrb[0].mxu0
      %v1299 = vadd.f32 0.0, %v1298
      %v1300 = vpop.f32.mrb[0].mxu0
      %1301 = vmatprep.mubr.f32.mxu0 0.0
      %1302 = vmatmul.mubr.f32.gmra.mrb[0].mxu0 %v418
      %v1303 = vpop.f32.mrb[0].mxu0
      %v1304 = vadd.f32 0.0, %v1303
      %v1305 = vpop.f32.mrb[0].mxu0
      %1306 = vmatprep.mubr.f32.mxu0 0.0
      %1307 = vmatmul.mubr.f32.gmra.mrb[0].mxu0 %v1165
      %v1308 = vpop.f32.mrb[0].mxu0
      %v1309 = vadd.f32 0.0, %v1308
      %v1310 = vpop.f32.mrb[0].mxu0
      %1311 = vmatprep.mubr.f32.mxu0 0.0
      %1312 = vmatmul.mubr.f32.gmra.mrb[0].mxu0 %v1167
      %v1313 = vpop.f32.mrb[0].mxu0
      %v1314 = vadd.f32 0.0, %v1313
      %v1315 = vpop.f32.mrb[0].mxu0
      %1316 = vdwg.mxu0
      %v1317 = vadd.f32 %v1142, %v1239
      %v1318 = vadd.f32 %v1143, %v1244
      %v1319 = vadd.f32 %v1144, %v1249
      %v1320 = vadd.f32 %v1145, %v1254
      %v1321 = vadd.f32 %v1146, %v1259
      %v1322 = vadd.f32 %v1147, %v1264
      %v1323 = vadd.f32 %v1148, %v1269
      %v1324 = vadd.f32 %v1149, %v1274
      %v1325 = vadd.f32 %v1150, %v1279
      %v1326 = vadd.f32 %v1151, %v1284
      %v1327 = vadd.f32 %v1152, %v1289
      %v1328 = vadd.f32 %v1153, %v1294
      %v1329 = vadd.f32 %v1154, %v1299
      %v1330 = vadd.f32 %v1155, %v1304
      %v1331 = vadd.f32 %v1156, %v1309
      %v1332 = vadd.f32 %v1157, %v1314
      %v1333 = vrot.slane %v314, 2
      %v1334 = vrot.slane %v315, 2
      %v1335 = vsel %vm749, %v1333, %v1334
      %v1336 = vrot.slane %v316, 2
      %v1337 = vsel %vm749, %v1334, %v1336
      %v1338 = vld [vmem:[%s2 + $0x14] sm:$0xf]
      %v1339 = vsel %vm387, %v1335, 0
      %v1341 = vsel %vm387, %v1337, 0
      %v1344 = vsel %vm420, %v1338, 0
      %1346 = vmatprep.subr.mxu0 0.0
      %1347 = vmatpush1.msra.mxu0 %v1344
      %1348 = vmatprep.subr.mxu0 0.0
      %1349 = vmatpush1.msra.mxu0 0.0
      %1350 = vmatprep.subr.mxu0 0.0
      %1351 = vmatpush1.msra.mxu0 0.0
      %1352 = vmatprep.subr.mxu0 0.0
      %1353 = vmatpush1.msra.mxu0 0.0
      %1354 = vmatprep.subr.mxu0 0.0
      %1355 = vmatpush1.msra.mxu0 0.0
      %1356 = vmatprep.subr.mxu0 0.0
      %1357 = vmatpush1.msra.mxu0 0.0
      %1358 = vmatprep.subr.mxu0 0.0
      %1359 = vmatpush1.msra.mxu0 0.0
      %1360 = vmatprep.subr.mxu0 0.0
      %1361 = vmatpush1.msra.mxu0 0.0
      %1362 = vmatprep.subr.mxu0 0.0
      %1363 = vmatpush1.msra.mxu0 0.0
      %1364 = vmatprep.subr.mxu0 0.0
      %1365 = vmatpush1.msra.mxu0 0.0
      %1366 = vmatprep.subr.mxu0 0.0
      %1367 = vmatpush1.msra.mxu0 0.0
      %1368 = vmatprep.subr.mxu0 0.0
      %1369 = vmatpush1.msra.mxu0 0.0
      %1370 = vmatprep.subr.mxu0 0.0
      %1371 = vmatpush1.msra.mxu0 0.0
      %1372 = vmatprep.subr.mxu0 0.0
      %1373 = vmatpush1.msra.mxu0 0.0
      %1374 = vmatprep.subr.mxu0 0.0
      %1375 = vmatpush1.msra.mxu0 0.0
      %1376 = vmatprep.subr.mxu0 0.0
      %1377 = vmatpush1.msra.mxu0 0.0
      %1378 = vmatprep.subr.mxu0 0.0
      %1379 = vmatpush1.msra.mxu0 0.0
      %1380 = vmatprep.subr.mxu0 0.0
      %1381 = vmatpush1.msra.mxu0 0.0
      %1382 = vmatprep.subr.mxu0 0.0
      %1383 = vmatpush1.msra.mxu0 0.0
      %1384 = vmatprep.subr.mxu0 0.0
      %1385 = vmatpush1.msra.mxu0 0.0
      %1386 = vmatprep.subr.mxu0 0.0
      %1387 = vmatpush1.msra.mxu0 0.0
      %1388 = vmatprep.subr.mxu0 0.0
      %1389 = vmatpush1.msra.mxu0 0.0
      %1390 = vmatprep.subr.mxu0 0.0
      %1391 = vmatpush1.msra.mxu0 0.0
      %1392 = vmatprep.subr.mxu0 0.0
      %1393 = vmatpush1.msra.mxu0 0.0
      %1394 = vmatprep.subr.mxu0 0.0
      %1395 = vmatpush1.msra.mxu0 0.0
      %1396 = vmatprep.subr.mxu0 0.0
      %1397 = vmatpush1.msra.mxu0 0.0
      %1398 = vmatprep.subr.mxu0 0.0
      %1399 = vmatpush1.msra.mxu0 0.0
      %1400 = vmatprep.subr.mxu0 0.0
      %1401 = vmatpush1.msra.mxu0 0.0
      %1402 = vmatprep.subr.mxu0 0.0
      %1403 = vmatpush1.msra.mxu0 0.0
      %1404 = vmatprep.subr.mxu0 0.0
      %1405 = vmatpush1.msra.mxu0 0.0
      %1406 = vmatprep.subr.mxu0 0.0
      %1407 = vmatpush1.msra.mxu0 0.0
      %1408 = vmatprep.subr.mxu0 0.0
      %1409 = vmatpush1.msra.mxu0 0.0
      %1410 = vmatprep.mubr.f32.mxu0 0.0
      %1411 = vmatmul.mubr.f32.gmra.mrb[0].mxu0 %v795
      %v1412 = vpop.f32.mrb[0].mxu0
      %v1413 = vadd.f32 0.0, %v1412
      %v1414 = vpop.f32.mrb[0].mxu0
      %1415 = vmatprep.mubr.f32.mxu0 0.0
      %1416 = vmatmul.mubr.f32.gmra.mrb[0].mxu0 %v797
      %v1417 = vpop.f32.mrb[0].mxu0
      %v1418 = vadd.f32 0.0, %v1417
      %v1419 = vpop.f32.mrb[0].mxu0
      %1420 = vmatprep.mubr.f32.mxu0 0.0
      %1421 = vmatmul.mubr.f32.gmra.mrb[0].mxu0 %v799
      %v1422 = vpop.f32.mrb[0].mxu0
      %v1423 = vadd.f32 0.0, %v1422
      %v1424 = vpop.f32.mrb[0].mxu0
      %1425 = vmatprep.mubr.f32.mxu0 0.0
      %1426 = vmatmul.mubr.f32.gmra.mrb[0].mxu0 %v801
      %v1427 = vpop.f32.mrb[0].mxu0
      %v1428 = vadd.f32 0.0, %v1427
      %v1429 = vpop.f32.mrb[0].mxu0
      %1430 = vmatprep.mubr.f32.mxu0 0.0
      %1431 = vmatmul.mubr.f32.gmra.mrb[0].mxu0 %v803
      %v1432 = vpop.f32.mrb[0].mxu0
      %v1433 = vadd.f32 0.0, %v1432
      %v1434 = vpop.f32.mrb[0].mxu0
      %1435 = vmatprep.mubr.f32.mxu0 0.0
      %1436 = vmatmul.mubr.f32.gmra.mrb[0].mxu0 %v805
      %v1437 = vpop.f32.mrb[0].mxu0
      %v1438 = vadd.f32 0.0, %v1437
      %v1439 = vpop.f32.mrb[0].mxu0
      %1440 = vmatprep.mubr.f32.mxu0 0.0
      %1441 = vmatmul.mubr.f32.gmra.mrb[0].mxu0 %v807
      %v1442 = vpop.f32.mrb[0].mxu0
      %v1443 = vadd.f32 0.0, %v1442
      %v1444 = vpop.f32.mrb[0].mxu0
      %1445 = vmatprep.mubr.f32.mxu0 0.0
      %1446 = vmatmul.mubr.f32.gmra.mrb[0].mxu0 %v809
      %v1447 = vpop.f32.mrb[0].mxu0
      %v1448 = vadd.f32 0.0, %v1447
      %v1449 = vpop.f32.mrb[0].mxu0
      %1450 = vmatprep.mubr.f32.mxu0 0.0
      %1451 = vmatmul.mubr.f32.gmra.mrb[0].mxu0 %v811
      %v1452 = vpop.f32.mrb[0].mxu0
      %v1453 = vadd.f32 0.0, %v1452
      %v1454 = vpop.f32.mrb[0].mxu0
      %1455 = vmatprep.mubr.f32.mxu0 0.0
      %1456 = vmatmul.mubr.f32.gmra.mrb[0].mxu0 %v813
      %v1457 = vpop.f32.mrb[0].mxu0
      %v1458 = vadd.f32 0.0, %v1457
      %v1459 = vpop.f32.mrb[0].mxu0
      %1460 = vmatprep.mubr.f32.mxu0 0.0
      %1461 = vmatmul.mubr.f32.gmra.mrb[0].mxu0 %v815
      %v1462 = vpop.f32.mrb[0].mxu0
      %v1463 = vadd.f32 0.0, %v1462
      %v1464 = vpop.f32.mrb[0].mxu0
      %1465 = vmatprep.mubr.f32.mxu0 0.0
      %1466 = vmatmul.mubr.f32.gmra.mrb[0].mxu0 %v817
      %v1467 = vpop.f32.mrb[0].mxu0
      %v1468 = vadd.f32 0.0, %v1467
      %v1469 = vpop.f32.mrb[0].mxu0
      %1470 = vmatprep.mubr.f32.mxu0 0.0
      %1471 = vmatmul.mubr.f32.gmra.mrb[0].mxu0 %v819
      %v1472 = vpop.f32.mrb[0].mxu0
      %v1473 = vadd.f32 0.0, %v1472
      %v1474 = vpop.f32.mrb[0].mxu0
      %1475 = vmatprep.mubr.f32.mxu0 0.0
      %1476 = vmatmul.mubr.f32.gmra.mrb[0].mxu0 %v821
      %v1477 = vpop.f32.mrb[0].mxu0
      %v1478 = vadd.f32 0.0, %v1477
      %v1479 = vpop.f32.mrb[0].mxu0
      %1480 = vmatprep.mubr.f32.mxu0 0.0
      %1481 = vmatmul.mubr.f32.gmra.mrb[0].mxu0 %v1339
      %v1482 = vpop.f32.mrb[0].mxu0
      %v1483 = vadd.f32 0.0, %v1482
      %v1484 = vpop.f32.mrb[0].mxu0
      %1485 = vmatprep.mubr.f32.mxu0 0.0
      %1486 = vmatmul.mubr.f32.gmra.mrb[0].mxu0 %v1341
      %v1487 = vpop.f32.mrb[0].mxu0
      %v1488 = vadd.f32 0.0, %v1487
      %v1489 = vpop.f32.mrb[0].mxu0
      %1490 = vdwg.mxu0
      %v1491 = vadd.f32 %v1317, %v1413
      %v1492 = vadd.f32 %v1318, %v1418
      %v1493 = vadd.f32 %v1319, %v1423
      %v1494 = vadd.f32 %v1320, %v1428
      %v1495 = vadd.f32 %v1321, %v1433
      %v1496 = vadd.f32 %v1322, %v1438
      %v1497 = vadd.f32 %v1323, %v1443
      %v1498 = vadd.f32 %v1324, %v1448
      %v1499 = vadd.f32 %v1325, %v1453
      %v1500 = vadd.f32 %v1326, %v1458
      %v1501 = vadd.f32 %v1327, %v1463
      %v1502 = vadd.f32 %v1328, %v1468
      %v1503 = vadd.f32 %v1329, %v1473
      %v1504 = vadd.f32 %v1330, %v1478
      %v1505 = vadd.f32 %v1331, %v1483
      %v1506 = vadd.f32 %v1332, %v1488
      %v1507 = vld [vmem:[%s2 + $0x18] sm:$0xf]
      %v1509 = vsel %vm387, %v317, 0
      %v1512 = vsel %vm387, %v318, 0
      %v1515 = vsel %vm420, %v1507, 0
      %1517 = vmatprep.subr.mxu0 0.0
      %1518 = vmatpush1.msra.mxu0 %v1515
      %1519 = vmatprep.subr.mxu0 0.0
      %1520 = vmatpush1.msra.mxu0 0.0
      %1521 = vmatprep.subr.mxu0 0.0
      %1522 = vmatpush1.msra.mxu0 0.0
      %1523 = vmatprep.subr.mxu0 0.0
      %1524 = vmatpush1.msra.mxu0 0.0
      %1525 = vmatprep.subr.mxu0 0.0
      %1526 = vmatpush1.msra.mxu0 0.0
      %1527 = vmatprep.subr.mxu0 0.0
      %1528 = vmatpush1.msra.mxu0 0.0
      %1529 = vmatprep.subr.mxu0 0.0
      %1530 = vmatpush1.msra.mxu0 0.0
      %1531 = vmatprep.subr.mxu0 0.0
      %1532 = vmatpush1.msra.mxu0 0.0
      %1533 = vmatprep.subr.mxu0 0.0
      %1534 = vmatpush1.msra.mxu0 0.0
      %1535 = vmatprep.subr.mxu0 0.0
      %1536 = vmatpush1.msra.mxu0 0.0
      %1537 = vmatprep.subr.mxu0 0.0
      %1538 = vmatpush1.msra.mxu0 0.0
      %1539 = vmatprep.subr.mxu0 0.0
      %1540 = vmatpush1.msra.mxu0 0.0
      %1541 = vmatprep.subr.mxu0 0.0
      %1542 = vmatpush1.msra.mxu0 0.0
      %1543 = vmatprep.subr.mxu0 0.0
      %1544 = vmatpush1.msra.mxu0 0.0
      %1545 = vmatprep.subr.mxu0 0.0
      %1546 = vmatpush1.msra.mxu0 0.0
      %1547 = vmatprep.subr.mxu0 0.0
      %1548 = vmatpush1.msra.mxu0 0.0
      %1549 = vmatprep.subr.mxu0 0.0
      %1550 = vmatpush1.msra.mxu0 0.0
      %1551 = vmatprep.subr.mxu0 0.0
      %1552 = vmatpush1.msra.mxu0 0.0
      %1553 = vmatprep.subr.mxu0 0.0
      %1554 = vmatpush1.msra.mxu0 0.0
      %1555 = vmatprep.subr.mxu0 0.0
      %1556 = vmatpush1.msra.mxu0 0.0
      %1557 = vmatprep.subr.mxu0 0.0
      %1558 = vmatpush1.msra.mxu0 0.0
      %1559 = vmatprep.subr.mxu0 0.0
      %1560 = vmatpush1.msra.mxu0 0.0
      %1561 = vmatprep.subr.mxu0 0.0
      %1562 = vmatpush1.msra.mxu0 0.0
      %1563 = vmatprep.subr.mxu0 0.0
      %1564 = vmatpush1.msra.mxu0 0.0
      %1565 = vmatprep.subr.mxu0 0.0
      %1566 = vmatpush1.msra.mxu0 0.0
      %1567 = vmatprep.subr.mxu0 0.0
      %1568 = vmatpush1.msra.mxu0 0.0
      %1569 = vmatprep.subr.mxu0 0.0
      %1570 = vmatpush1.msra.mxu0 0.0
      %1571 = vmatprep.subr.mxu0 0.0
      %1572 = vmatpush1.msra.mxu0 0.0
      %1573 = vmatprep.subr.mxu0 0.0
      %1574 = vmatpush1.msra.mxu0 0.0
      %1575 = vmatprep.subr.mxu0 0.0
      %1576 = vmatpush1.msra.mxu0 0.0
      %1577 = vmatprep.subr.mxu0 0.0
      %1578 = vmatpush1.msra.mxu0 0.0
      %1579 = vmatprep.subr.mxu0 0.0
      %1580 = vmatpush1.msra.mxu0 0.0
      %1581 = vmatprep.mubr.f32.mxu0 0.0
      %1582 = vmatmul.mubr.f32.gmra.mrb[0].mxu0 %v577
      %v1583 = vpop.f32.mrb[0].mxu0
      %v1584 = vadd.f32 0.0, %v1583
      %v1585 = vpop.f32.mrb[0].mxu0
      %1586 = vmatprep.mubr.f32.mxu0 0.0
      %1587 = vmatmul.mubr.f32.gmra.mrb[0].mxu0 %v579
      %v1588 = vpop.f32.mrb[0].mxu0
      %v1589 = vadd.f32 0.0, %v1588
      %v1590 = vpop.f32.mrb[0].mxu0
      %1591 = vmatprep.mubr.f32.mxu0 0.0
      %1592 = vmatmul.mubr.f32.gmra.mrb[0].mxu0 %v581
      %v1593 = vpop.f32.mrb[0].mxu0
      %v1594 = vadd.f32 0.0, %v1593
      %v1595 = vpop.f32.mrb[0].mxu0
      %1596 = vmatprep.mubr.f32.mxu0 0.0
      %1597 = vmatmul.mubr.f32.gmra.mrb[0].mxu0 %v583
      %v1598 = vpop.f32.mrb[0].mxu0
      %v1599 = vadd.f32 0.0, %v1598
      %v1600 = vpop.f32.mrb[0].mxu0
      %1601 = vmatprep.mubr.f32.mxu0 0.0
      %1602 = vmatmul.mubr.f32.gmra.mrb[0].mxu0 %v585
      %v1603 = vpop.f32.mrb[0].mxu0
      %v1604 = vadd.f32 0.0, %v1603
      %v1605 = vpop.f32.mrb[0].mxu0
      %1606 = vmatprep.mubr.f32.mxu0 0.0
      %1607 = vmatmul.mubr.f32.gmra.mrb[0].mxu0 %v587
      %v1608 = vpop.f32.mrb[0].mxu0
      %v1609 = vadd.f32 0.0, %v1608
      %v1610 = vpop.f32.mrb[0].mxu0
      %1611 = vmatprep.mubr.f32.mxu0 0.0
      %1612 = vmatmul.mubr.f32.gmra.mrb[0].mxu0 %v589
      %v1613 = vpop.f32.mrb[0].mxu0
      %v1614 = vadd.f32 0.0, %v1613
      %v1615 = vpop.f32.mrb[0].mxu0
      %1616 = vmatprep.mubr.f32.mxu0 0.0
      %1617 = vmatmul.mubr.f32.gmra.mrb[0].mxu0 %v591
      %v1618 = vpop.f32.mrb[0].mxu0
      %v1619 = vadd.f32 0.0, %v1618
      %v1620 = vpop.f32.mrb[0].mxu0
      %1621 = vmatprep.mubr.f32.mxu0 0.0
      %1622 = vmatmul.mubr.f32.gmra.mrb[0].mxu0 %v593
      %v1623 = vpop.f32.mrb[0].mxu0
      %v1624 = vadd.f32 0.0, %v1623
      %v1625 = vpop.f32.mrb[0].mxu0
      %1626 = vmatprep.mubr.f32.mxu0 0.0
      %1627 = vmatmul.mubr.f32.gmra.mrb[0].mxu0 %v595
      %v1628 = vpop.f32.mrb[0].mxu0
      %v1629 = vadd.f32 0.0, %v1628
      %v1630 = vpop.f32.mrb[0].mxu0
      %1631 = vmatprep.mubr.f32.mxu0 0.0
      %1632 = vmatmul.mubr.f32.gmra.mrb[0].mxu0 %v597
      %v1633 = vpop.f32.mrb[0].mxu0
      %v1634 = vadd.f32 0.0, %v1633
      %v1635 = vpop.f32.mrb[0].mxu0
      %1636 = vmatprep.mubr.f32.mxu0 0.0
      %1637 = vmatmul.mubr.f32.gmra.mrb[0].mxu0 %v599
      %v1638 = vpop.f32.mrb[0].mxu0
      %v1639 = vadd.f32 0.0, %v1638
      %v1640 = vpop.f32.mrb[0].mxu0
      %1641 = vmatprep.mubr.f32.mxu0 0.0
      %1642 = vmatmul.mubr.f32.gmra.mrb[0].mxu0 %v989
      %v1643 = vpop.f32.mrb[0].mxu0
      %v1644 = vadd.f32 0.0, %v1643
      %v1645 = vpop.f32.mrb[0].mxu0
      %1646 = vmatprep.mubr.f32.mxu0 0.0
      %1647 = vmatmul.mubr.f32.gmra.mrb[0].mxu0 %v992
      %v1648 = vpop.f32.mrb[0].mxu0
      %v1649 = vadd.f32 0.0, %v1648
      %v1650 = vpop.f32.mrb[0].mxu0
      %1651 = vmatprep.mubr.f32.mxu0 0.0
      %1652 = vmatmul.mubr.f32.gmra.mrb[0].mxu0 %v1509
      %v1653 = vpop.f32.mrb[0].mxu0
      %v1654 = vadd.f32 0.0, %v1653
      %v1655 = vpop.f32.mrb[0].mxu0
      %1656 = vmatprep.mubr.f32.mxu0 0.0
      %1657 = vmatmul.mubr.f32.gmra.mrb[0].mxu0 %v1512
      %v1658 = vpop.f32.mrb[0].mxu0
      %v1659 = vadd.f32 0.0, %v1658
      %v1660 = vpop.f32.mrb[0].mxu0
      %1661 = vdwg.mxu0
      %v1662 = vadd.f32 %v1491, %v1584
      %v1663 = vadd.f32 %v1492, %v1589
      %v1664 = vadd.f32 %v1493, %v1594
      %v1665 = vadd.f32 %v1494, %v1599
      %v1666 = vadd.f32 %v1495, %v1604
      %v1667 = vadd.f32 %v1496, %v1609
      %v1668 = vadd.f32 %v1497, %v1614
      %v1669 = vadd.f32 %v1498, %v1619
      %v1670 = vadd.f32 %v1499, %v1624
      %v1671 = vadd.f32 %v1500, %v1629
      %v1672 = vadd.f32 %v1501, %v1634
      %v1673 = vadd.f32 %v1502, %v1639
      %v1674 = vadd.f32 %v1503, %v1644
      %v1675 = vadd.f32 %v1504, %v1649
      %v1676 = vadd.f32 %v1505, %v1654
      %v1677 = vadd.f32 %v1506, %v1659
      %v1679 = vrot.slane %v317, 1
      %v1680 = vrot.slane %v318, 1
      %v1681 = vsel %vm345, %v1679, %v1680
      %v1682 = vrot.slane %v319, 1
      %v1683 = vsel %vm345, %v1680, %v1682
      %v1684 = vld [vmem:[%s2 + $0x1c] sm:$0xf]
      %v1685 = vsel %vm387, %v1681, 0
      %v1687 = vsel %vm387, %v1683, 0
      %v1690 = vsel %vm420, %v1684, 0
      %1692 = vmatprep.subr.mxu0 0.0
      %1693 = vmatpush1.msra.mxu0 %v1690
      %1694 = vmatprep.subr.mxu0 0.0
      %1695 = vmatpush1.msra.mxu0 0.0
      %1696 = vmatprep.subr.mxu0 0.0
      %1697 = vmatpush1.msra.mxu0 0.0
      %1698 = vmatprep.subr.mxu0 0.0
      %1699 = vmatpush1.msra.mxu0 0.0
      %1700 = vmatprep.subr.mxu0 0.0
      %1701 = vmatpush1.msra.mxu0 0.0
      %1702 = vmatprep.subr.mxu0 0.0
      %1703 = vmatpush1.msra.mxu0 0.0
      %1704 = vmatprep.subr.mxu0 0.0
      %1705 = vmatpush1.msra.mxu0 0.0
      %1706 = vmatprep.subr.mxu0 0.0
      %1707 = vmatpush1.msra.mxu0 0.0
      %1708 = vmatprep.subr.mxu0 0.0
      %1709 = vmatpush1.msra.mxu0 0.0
      %1710 = vmatprep.subr.mxu0 0.0
      %1711 = vmatpush1.msra.mxu0 0.0
      %1712 = vmatprep.subr.mxu0 0.0
      %1713 = vmatpush1.msra.mxu0 0.0
      %1714 = vmatprep.subr.mxu0 0.0
      %1715 = vmatpush1.msra.mxu0 0.0
      %1716 = vmatprep.subr.mxu0 0.0
      %1717 = vmatpush1.msra.mxu0 0.0
      %1718 = vmatprep.subr.mxu0 0.0
      %1719 = vmatpush1.msra.mxu0 0.0
      %1720 = vmatprep.subr.mxu0 0.0
      %1721 = vmatpush1.msra.mxu0 0.0
      %1722 = vmatprep.subr.mxu0 0.0
      %1723 = vmatpush1.msra.mxu0 0.0
      %1724 = vmatprep.subr.mxu0 0.0
      %1725 = vmatpush1.msra.mxu0 0.0
      %1726 = vmatprep.subr.mxu0 0.0
      %1727 = vmatpush1.msra.mxu0 0.0
      %1728 = vmatprep.subr.mxu0 0.0
      %1729 = vmatpush1.msra.mxu0 0.0
      %1730 = vmatprep.subr.mxu0 0.0
      %1731 = vmatpush1.msra.mxu0 0.0
      %1732 = vmatprep.subr.mxu0 0.0
      %1733 = vmatpush1.msra.mxu0 0.0
      %1734 = vmatprep.subr.mxu0 0.0
      %1735 = vmatpush1.msra.mxu0 0.0
      %1736 = vmatprep.subr.mxu0 0.0
      %1737 = vmatpush1.msra.mxu0 0.0
      %1738 = vmatprep.subr.mxu0 0.0
      %1739 = vmatpush1.msra.mxu0 0.0
      %1740 = vmatprep.subr.mxu0 0.0
      %1741 = vmatpush1.msra.mxu0 0.0
      %1742 = vmatprep.subr.mxu0 0.0
      %1743 = vmatpush1.msra.mxu0 0.0
      %1744 = vmatprep.subr.mxu0 0.0
      %1745 = vmatpush1.msra.mxu0 0.0
      %1746 = vmatprep.subr.mxu0 0.0
      %1747 = vmatpush1.msra.mxu0 0.0
      %1748 = vmatprep.subr.mxu0 0.0
      %1749 = vmatpush1.msra.mxu0 0.0
      %1750 = vmatprep.subr.mxu0 0.0
      %1751 = vmatpush1.msra.mxu0 0.0
      %1752 = vmatprep.subr.mxu0 0.0
      %1753 = vmatpush1.msra.mxu0 0.0
      %1754 = vmatprep.subr.mxu0 0.0
      %1755 = vmatpush1.msra.mxu0 0.0
      %1756 = vmatprep.mubr.f32.mxu0 0.0
      %1757 = vmatmul.mubr.f32.gmra.mrb[0].mxu0 %v396
      %v1758 = vpop.f32.mrb[0].mxu0
      %v1759 = vadd.f32 0.0, %v1758
      %v1760 = vpop.f32.mrb[0].mxu0
      %1761 = vmatprep.mubr.f32.mxu0 0.0
      %1762 = vmatmul.mubr.f32.gmra.mrb[0].mxu0 %v398
      %v1763 = vpop.f32.mrb[0].mxu0
      %v1764 = vadd.f32 0.0, %v1763
      %v1765 = vpop.f32.mrb[0].mxu0
      %1766 = vmatprep.mubr.f32.mxu0 0.0
      %1767 = vmatmul.mubr.f32.gmra.mrb[0].mxu0 %v400
      %v1768 = vpop.f32.mrb[0].mxu0
      %v1769 = vadd.f32 0.0, %v1768
      %v1770 = vpop.f32.mrb[0].mxu0
      %1771 = vmatprep.mubr.f32.mxu0 0.0
      %1772 = vmatmul.mubr.f32.gmra.mrb[0].mxu0 %v402
      %v1773 = vpop.f32.mrb[0].mxu0
      %v1774 = vadd.f32 0.0, %v1773
      %v1775 = vpop.f32.mrb[0].mxu0
      %1776 = vmatprep.mubr.f32.mxu0 0.0
      %1777 = vmatmul.mubr.f32.gmra.mrb[0].mxu0 %v404
      %v1778 = vpop.f32.mrb[0].mxu0
      %v1779 = vadd.f32 0.0, %v1778
      %v1780 = vpop.f32.mrb[0].mxu0
      %1781 = vmatprep.mubr.f32.mxu0 0.0
      %1782 = vmatmul.mubr.f32.gmra.mrb[0].mxu0 %v406
      %v1783 = vpop.f32.mrb[0].mxu0
      %v1784 = vadd.f32 0.0, %v1783
      %v1785 = vpop.f32.mrb[0].mxu0
      %1786 = vmatprep.mubr.f32.mxu0 0.0
      %1787 = vmatmul.mubr.f32.gmra.mrb[0].mxu0 %v408
      %v1788 = vpop.f32.mrb[0].mxu0
      %v1789 = vadd.f32 0.0, %v1788
      %v1790 = vpop.f32.mrb[0].mxu0
      %1791 = vmatprep.mubr.f32.mxu0 0.0
      %1792 = vmatmul.mubr.f32.gmra.mrb[0].mxu0 %v410
      %v1793 = vpop.f32.mrb[0].mxu0
      %v1794 = vadd.f32 0.0, %v1793
      %v1795 = vpop.f32.mrb[0].mxu0
      %1796 = vmatprep.mubr.f32.mxu0 0.0
      %1797 = vmatmul.mubr.f32.gmra.mrb[0].mxu0 %v412
      %v1798 = vpop.f32.mrb[0].mxu0
      %v1799 = vadd.f32 0.0, %v1798
      %v1800 = vpop.f32.mrb[0].mxu0
      %1801 = vmatprep.mubr.f32.mxu0 0.0
      %1802 = vmatmul.mubr.f32.gmra.mrb[0].mxu0 %v414
      %v1803 = vpop.f32.mrb[0].mxu0
      %v1804 = vadd.f32 0.0, %v1803
      %v1805 = vpop.f32.mrb[0].mxu0
      %1806 = vmatprep.mubr.f32.mxu0 0.0
      %1807 = vmatmul.mubr.f32.gmra.mrb[0].mxu0 %v416
      %v1808 = vpop.f32.mrb[0].mxu0
      %v1809 = vadd.f32 0.0, %v1808
      %v1810 = vpop.f32.mrb[0].mxu0
      %1811 = vmatprep.mubr.f32.mxu0 0.0
      %1812 = vmatmul.mubr.f32.gmra.mrb[0].mxu0 %v418
      %v1813 = vpop.f32.mrb[0].mxu0
      %v1814 = vadd.f32 0.0, %v1813
      %v1815 = vpop.f32.mrb[0].mxu0
      %1816 = vmatprep.mubr.f32.mxu0 0.0
      %1817 = vmatmul.mubr.f32.gmra.mrb[0].mxu0 %v1165
      %v1818 = vpop.f32.mrb[0].mxu0
      %v1819 = vadd.f32 0.0, %v1818
      %v1820 = vpop.f32.mrb[0].mxu0
      %1821 = vmatprep.mubr.f32.mxu0 0.0
      %1822 = vmatmul.mubr.f32.gmra.mrb[0].mxu0 %v1167
      %v1823 = vpop.f32.mrb[0].mxu0
      %v1824 = vadd.f32 0.0, %v1823
      %v1825 = vpop.f32.mrb[0].mxu0
      %1826 = vmatprep.mubr.f32.mxu0 0.0
      %1827 = vmatmul.mubr.f32.gmra.mrb[0].mxu0 %v1685
      %v1828 = vpop.f32.mrb[0].mxu0
      %v1829 = vadd.f32 0.0, %v1828
      %v1830 = vpop.f32.mrb[0].mxu0
      %1831 = vmatprep.mubr.f32.mxu0 0.0
      %1832 = vmatmul.mubr.f32.gmra.mrb[0].mxu0 %v1687
      %v1833 = vpop.f32.mrb[0].mxu0
      %v1834 = vadd.f32 0.0, %v1833
      %v1835 = vpop.f32.mrb[0].mxu0
      %1836 = vdwg.mxu0
      %v1837 = vadd.f32 %v1662, %v1759
      %v1838 = vadd.f32 %v1663, %v1764
      %v1839 = vadd.f32 %v1664, %v1769
      %v1840 = vadd.f32 %v1665, %v1774
      %v1841 = vadd.f32 %v1666, %v1779
      %v1842 = vadd.f32 %v1667, %v1784
      %v1843 = vadd.f32 %v1668, %v1789
      %v1844 = vadd.f32 %v1669, %v1794
      %v1845 = vadd.f32 %v1670, %v1799
      %v1846 = vadd.f32 %v1671, %v1804
      %v1847 = vadd.f32 %v1672, %v1809
      %v1848 = vadd.f32 %v1673, %v1814
      %v1849 = vadd.f32 %v1674, %v1819
      %v1850 = vadd.f32 %v1675, %v1824
      %v1851 = vadd.f32 %v1676, %v1829
      %v1852 = vadd.f32 %v1677, %v1834
      %v1853 = vrot.slane %v317, 2
      %v1854 = vrot.slane %v318, 2
      %v1855 = vsel %vm749, %v1853, %v1854
      %v1856 = vrot.slane %v319, 2
      %v1857 = vsel %vm749, %v1854, %v1856
      %v1858 = vld [vmem:[%s2 + $0x20] sm:$0xf]
      %v1859 = vsel %vm387, %v1855, 0
      %v1861 = vsel %vm387, %v1857, 0
      %v1864 = vsel %vm420, %v1858, 0
      %1866 = vmatprep.subr.mxu0 0.0
      %1867 = vmatpush1.msra.mxu0 %v1864
      %1868 = vmatprep.subr.mxu0 0.0
      %1869 = vmatpush1.msra.mxu0 0.0
      %1870 = vmatprep.subr.mxu0 0.0
      %1871 = vmatpush1.msra.mxu0 0.0
      %1872 = vmatprep.subr.mxu0 0.0
      %1873 = vmatpush1.msra.mxu0 0.0
      %1874 = vmatprep.subr.mxu0 0.0
      %1875 = vmatpush1.msra.mxu0 0.0
      %1876 = vmatprep.subr.mxu0 0.0
      %1877 = vmatpush1.msra.mxu0 0.0
      %1878 = vmatprep.subr.mxu0 0.0
      %1879 = vmatpush1.msra.mxu0 0.0
      %1880 = vmatprep.subr.mxu0 0.0
      %1881 = vmatpush1.msra.mxu0 0.0
      %1882 = vmatprep.subr.mxu0 0.0
      %1883 = vmatpush1.msra.mxu0 0.0
      %1884 = vmatprep.subr.mxu0 0.0
      %1885 = vmatpush1.msra.mxu0 0.0
      %1886 = vmatprep.subr.mxu0 0.0
      %1887 = vmatpush1.msra.mxu0 0.0
      %1888 = vmatprep.subr.mxu0 0.0
      %1889 = vmatpush1.msra.mxu0 0.0
      %1890 = vmatprep.subr.mxu0 0.0
      %1891 = vmatpush1.msra.mxu0 0.0
      %1892 = vmatprep.subr.mxu0 0.0
      %1893 = vmatpush1.msra.mxu0 0.0
      %1894 = vmatprep.subr.mxu0 0.0
      %1895 = vmatpush1.msra.mxu0 0.0
      %1896 = vmatprep.subr.mxu0 0.0
      %1897 = vmatpush1.msra.mxu0 0.0
      %1898 = vmatprep.subr.mxu0 0.0
      %1899 = vmatpush1.msra.mxu0 0.0
      %1900 = vmatprep.subr.mxu0 0.0
      %1901 = vmatpush1.msra.mxu0 0.0
      %1902 = vmatprep.subr.mxu0 0.0
      %1903 = vmatpush1.msra.mxu0 0.0
      %1904 = vmatprep.subr.mxu0 0.0
      %1905 = vmatpush1.msra.mxu0 0.0
      %1906 = vmatprep.subr.mxu0 0.0
      %1907 = vmatpush1.msra.mxu0 0.0
      %1908 = vmatprep.subr.mxu0 0.0
      %1909 = vmatpush1.msra.mxu0 0.0
      %1910 = vmatprep.subr.mxu0 0.0
      %1911 = vmatpush1.msra.mxu0 0.0
      %1912 = vmatprep.subr.mxu0 0.0
      %1913 = vmatpush1.msra.mxu0 0.0
      %1914 = vmatprep.subr.mxu0 0.0
      %1915 = vmatpush1.msra.mxu0 0.0
      %1916 = vmatprep.subr.mxu0 0.0
      %1917 = vmatpush1.msra.mxu0 0.0
      %1918 = vmatprep.subr.mxu0 0.0
      %1919 = vmatpush1.msra.mxu0 0.0
      %1920 = vmatprep.subr.mxu0 0.0
      %1921 = vmatpush1.msra.mxu0 0.0
      %1922 = vmatprep.subr.mxu0 0.0
      %1923 = vmatpush1.msra.mxu0 0.0
      %1924 = vmatprep.subr.mxu0 0.0
      %1925 = vmatpush1.msra.mxu0 0.0
      %1926 = vmatprep.subr.mxu0 0.0
      %1927 = vmatpush1.msra.mxu0 0.0
      %1928 = vmatprep.subr.mxu0 0.0
      %1929 = vmatpush1.msra.mxu0 0.0
      %1930 = vmatprep.mubr.f32.mxu0 0.0
      %1931 = vmatmul.mubr.f32.gmra.mrb[0].mxu0 %v799
      %v1932 = vpop.f32.mrb[0].mxu0
      %v1933 = vadd.f32 0.0, %v1932
      %v1934 = vpop.f32.mrb[0].mxu0
      %1935 = vmatprep.mubr.f32.mxu0 0.0
      %1936 = vmatmul.mubr.f32.gmra.mrb[0].mxu0 %v801
      %v1937 = vpop.f32.mrb[0].mxu0
      %v1938 = vadd.f32 0.0, %v1937
      %v1939 = vpop.f32.mrb[0].mxu0
      %1940 = vmatprep.mubr.f32.mxu0 0.0
      %1941 = vmatmul.mubr.f32.gmra.mrb[0].mxu0 %v803
      %v1942 = vpop.f32.mrb[0].mxu0
      %v1943 = vadd.f32 0.0, %v1942
      %v1944 = vpop.f32.mrb[0].mxu0
      %1945 = vmatprep.mubr.f32.mxu0 0.0
      %1946 = vmatmul.mubr.f32.gmra.mrb[0].mxu0 %v805
      %v1947 = vpop.f32.mrb[0].mxu0
      %v1948 = vadd.f32 0.0, %v1947
      %v1949 = vpop.f32.mrb[0].mxu0
      %1950 = vmatprep.mubr.f32.mxu0 0.0
      %1951 = vmatmul.mubr.f32.gmra.mrb[0].mxu0 %v807
      %v1952 = vpop.f32.mrb[0].mxu0
      %v1953 = vadd.f32 0.0, %v1952
      %v1954 = vpop.f32.mrb[0].mxu0
      %1955 = vmatprep.mubr.f32.mxu0 0.0
      %1956 = vmatmul.mubr.f32.gmra.mrb[0].mxu0 %v809
      %v1957 = vpop.f32.mrb[0].mxu0
      %v1958 = vadd.f32 0.0, %v1957
      %v1959 = vpop.f32.mrb[0].mxu0
      %1960 = vmatprep.mubr.f32.mxu0 0.0
      %1961 = vmatmul.mubr.f32.gmra.mrb[0].mxu0 %v811
      %v1962 = vpop.f32.mrb[0].mxu0
      %v1963 = vadd.f32 0.0, %v1962
      %v1964 = vpop.f32.mrb[0].mxu0
      %1965 = vmatprep.mubr.f32.mxu0 0.0
      %1966 = vmatmul.mubr.f32.gmra.mrb[0].mxu0 %v813
      %v1967 = vpop.f32.mrb[0].mxu0
      %v1968 = vadd.f32 0.0, %v1967
      %v1969 = vpop.f32.mrb[0].mxu0
      %1970 = vmatprep.mubr.f32.mxu0 0.0
      %1971 = vmatmul.mubr.f32.gmra.mrb[0].mxu0 %v815
      %v1972 = vpop.f32.mrb[0].mxu0
      %v1973 = vadd.f32 0.0, %v1972
      %v1974 = vpop.f32.mrb[0].mxu0
      %1975 = vmatprep.mubr.f32.mxu0 0.0
      %1976 = vmatmul.mubr.f32.gmra.mrb[0].mxu0 %v817
      %v1977 = vpop.f32.mrb[0].mxu0
      %v1978 = vadd.f32 0.0, %v1977
      %v1979 = vpop.f32.mrb[0].mxu0
      %1980 = vmatprep.mubr.f32.mxu0 0.0
      %1981 = vmatmul.mubr.f32.gmra.mrb[0].mxu0 %v819
      %v1982 = vpop.f32.mrb[0].mxu0
      %v1983 = vadd.f32 0.0, %v1982
      %v1984 = vpop.f32.mrb[0].mxu0
      %1985 = vmatprep.mubr.f32.mxu0 0.0
      %1986 = vmatmul.mubr.f32.gmra.mrb[0].mxu0 %v821
      %v1987 = vpop.f32.mrb[0].mxu0
      %v1988 = vadd.f32 0.0, %v1987
      %v1989 = vpop.f32.mrb[0].mxu0
      %1990 = vmatprep.mubr.f32.mxu0 0.0
      %1991 = vmatmul.mubr.f32.gmra.mrb[0].mxu0 %v1339
      %v1992 = vpop.f32.mrb[0].mxu0
      %v1993 = vadd.f32 0.0, %v1992
      %v1994 = vpop.f32.mrb[0].mxu0
      %1995 = vmatprep.mubr.f32.mxu0 0.0
      %1996 = vmatmul.mubr.f32.gmra.mrb[0].mxu0 %v1341
      %v1997 = vpop.f32.mrb[0].mxu0
      %v1998 = vadd.f32 0.0, %v1997
      %v1999 = vpop.f32.mrb[0].mxu0
      %2000 = vmatprep.mubr.f32.mxu0 0.0
      %2001 = vmatmul.mubr.f32.gmra.mrb[0].mxu0 %v1859
      %v2002 = vpop.f32.mrb[0].mxu0
      %v2003 = vadd.f32 0.0, %v2002
      %v2004 = vpop.f32.mrb[0].mxu0
      %2005 = vmatprep.mubr.f32.mxu0 0.0
      %2006 = vmatmul.mubr.f32.gmra.mrb[0].mxu0 %v1861
      %v2007 = vpop.f32.mrb[0].mxu0
      %v2008 = vadd.f32 0.0, %v2007
      %v2009 = vpop.f32.mrb[0].mxu0
      %2010 = vdwg.mxu0
      %v2011 = vadd.f32 %v1837, %v1933
      %v2012 = vadd.f32 %v1838, %v1938
      %v2013 = vadd.f32 %v1839, %v1943
      %v2014 = vadd.f32 %v1840, %v1948
      %v2015 = vadd.f32 %v1841, %v1953
      %v2016 = vadd.f32 %v1842, %v1958
      %v2017 = vadd.f32 %v1843, %v1963
      %v2018 = vadd.f32 %v1844, %v1968
      %v2019 = vadd.f32 %v1845, %v1973
      %v2020 = vadd.f32 %v1846, %v1978
      %v2021 = vadd.f32 %v1847, %v1983
      %v2022 = vadd.f32 %v1848, %v1988
      %v2023 = vadd.f32 %v1849, %v1993
      %v2024 = vadd.f32 %v1850, %v1998
      %v2025 = vadd.f32 %v1851, %v2003
      %v2026 = vadd.f32 %v1852, %v2008
      %v2027 = vmul.f32 %v2011, 0.01
      %v2028 = vmul.f32 %v2012, 0.01
      %v2029 = vmul.f32 %v2013, 0.01
      %v2030 = vmul.f32 %v2014, 0.01
      %v2031 = vmul.f32 %v2015, 0.01
      %v2032 = vmul.f32 %v2016, 0.01
      %v2033 = vmul.f32 %v2017, 0.01
      %v2034 = vmul.f32 %v2018, 0.01
      %v2035 = vmul.f32 %v2019, 0.01
      %v2036 = vmul.f32 %v2020, 0.01
      %v2037 = vmul.f32 %v2021, 0.01
      %v2038 = vmul.f32 %v2022, 0.01
      %v2039 = vmul.f32 %v2023, 0.01
      %v2040 = vmul.f32 %v2024, 0.01
      %v2041 = vmul.f32 %v2025, 0.01
      %v2042 = vmul.f32 %v2026, 0.01
      %v2043 = vmax.f32 %v2011, %v2027
      %v2044 = vmax.f32 %v2012, %v2028
      %v2045 = vmax.f32 %v2013, %v2029
      %v2046 = vmax.f32 %v2014, %v2030
      %v2047 = vmax.f32 %v2015, %v2031
      %v2048 = vmax.f32 %v2016, %v2032
      %v2049 = vmax.f32 %v2017, %v2033
      %v2050 = vmax.f32 %v2018, %v2034
      %v2051 = vmax.f32 %v2019, %v2035
      %v2052 = vmax.f32 %v2020, %v2036
      %v2053 = vmax.f32 %v2021, %v2037
      %v2054 = vmax.f32 %v2022, %v2038
      %v2055 = vmax.f32 %v2023, %v2039
      %v2056 = vmax.f32 %v2024, %v2040
      %v2057 = vmax.f32 %v2025, %v2041
      %v2058 = vmax.f32 %v2026, %v2042
      %vm2059 = vcmask 261120
      %2060 = vst.msk [vmem:[%s289] sm:$0xff] %vm2059, %v2043
      %2061 = vst.msk [vmem:[%s289 + $0x8] sm:$0xff] %vm2059, %v2044
      %2062 = vst.msk [vmem:[%s289 + $0x10] sm:$0xff] %vm2059, %v2045
      %2063 = vst.msk [vmem:[%s289 + $0x18] sm:$0xff] %vm2059, %v2046
      %2064 = vst.msk [vmem:[%s289 + $0x20] sm:$0xff] %vm2059, %v2047
      %2065 = vst.msk [vmem:[%s289 + $0x28] sm:$0xff] %vm2059, %v2048
      %2066 = vst.msk [vmem:[%s289 + $0x30] sm:$0xff] %vm2059, %v2049
      %2067 = vst.msk [vmem:[%s289 + $0x38] sm:$0xff] %vm2059, %v2050
      %2068 = vst.msk [vmem:[%s289 + $0x40] sm:$0xff] %vm2059, %v2051
      %2069 = vst.msk [vmem:[%s289 + $0x48] sm:$0xff] %vm2059, %v2052
      %2070 = vst.msk [vmem:[%s289 + $0x50] sm:$0xff] %vm2059, %v2053
      %2071 = vst.msk [vmem:[%s289 + $0x58] sm:$0xff] %vm2059, %v2054
      %2072 = vst.msk [vmem:[%s289 + $0x60] sm:$0xff] %vm2059, %v2055
      %2073 = vst.msk [vmem:[%s289 + $0x68] sm:$0xff] %vm2059, %v2056
      %2074 = vst.msk [vmem:[%s289 + $0x70] sm:$0xff] %vm2059, %v2057
      %2075 = vst.msk [vmem:[%s289 + $0x78] sm:$0xff] %vm2059, %v2058
      %p2076 = scmp.lt.s32.totalorder %s18, 1
      %s2077 = scalar_select %p2076, %s18, 1
      %p2078 = scmp.lt.s32.totalorder %s19, 1
      %s2079 = scalar_select %p2078, %s19, 1
      %s2080 = smul.addr %s2079, 16
      %s2081 = smul.addr %s2077, 32
      %s2082 = sadd.s32 %s2080, %s2081
      %s2083 = smul.addr %s2082, 8
      %s2084 = scalar_lea.vmem %s3, %s2083
      // Predicated region
      $region33: #{basic_deconv.1} parent=31 // pred_check
        %p2085 = pneg %p127
      $region34: #{basic_deconv.1} parent=31 // pred_check_branch
        %2087 = sbr.rel (%p2085) target = $region36
      $region35: #{basic_deconv.1} parent=31 // pred_region
        _
      $region36: #{basic_deconv.1} parent=31 // pred_fallthru
        _
    $region32: #{basic_deconv.1} parent=5 // pred_fallthru
      _
    %p2088 = scmp.le.s32.totalorder 2, %s9
    // Predicated region
    $region37: #{basic_deconv.1} parent=5 // pred_check
      %p2089 = pneg %p2088
    $region38: #{basic_deconv.1} parent=5 // pred_check_branch
      %2091 = sbr.rel (%p2089) target = $region40
    $region39: #{basic_deconv.1} parent=5 // pred_region
      %s2092 = ssub.s32 %s9, 2
      // Predicated region
      $region41: #{basic_deconv.1} parent=39 // pred_check
        %p2093 = pneg %p133
      $region42: #{basic_deconv.1} parent=39 // pred_check_branch
        %2095 = sbr.rel (%p2093) target = $region44
      $region43: #{basic_deconv.1} parent=39 // pred_region
        %p2096 = scmp.lt.s32.totalorder %s20, 1
        %s2097 = scalar_select %p2096, %s20, 1
        %p2098 = scmp.lt.s32.totalorder %s21, 1
        %s2099 = scalar_select %p2098, %s21, 1
        %s2100 = smul.addr %s2099, 16
        %s2101 = smul.addr %s2097, 32
        %s2102 = sadd.s32 %s2100, %s2101
        %s2103 = smul.addr %s2102, 8
        %s2104 = scalar_lea.vmem %s3, %s2103
      $region44: #{basic_deconv.1} parent=39 // pred_fallthru
        _
    $region40: #{basic_deconv.1} parent=5 // pred_fallthru
      _
  $region6: #{basic_deconv.1} parent=0 // loop_footer
    %s13 = sadd.s32 1, %s9
  $region7: #{basic_deconv.1} parent=0 // loop_footer_branch
    %8 = sbr.rel target = $region3
  $region8: #{basic_deconv.1} parent=0 // loop_exit
    _

</llo_original>
